<compile_context>
chip_gen: v5e
topology: v5e:2x2
jax: 0.10.0
libtpu: 0.0.40
codegen_flags: <defaults>
</compile_context>

<pallas_src>
import functools

import jax
import jax.numpy as jnp
from jax.experimental import pallas as pl
from jax.experimental.pallas import tpu as pltpu

EPS = 1e-5  # nn.BatchNorm2d default eps

_VMEM_LIMIT_CACHE = []


def _vmem_limit_bytes():
    """Generation-aware scoped-VMEM limit (default is only 16/32 MiB)."""
    if not _VMEM_LIMIT_CACHE:
        try:
            cap = pltpu.get_tpu_info().vmem_capacity_bytes
            lim = int(min(cap * 3 // 4, 96 * 1024 * 1024))
        except Exception:
            lim = 48 * 1024 * 1024  # safe on v5e/v6e/v7x
        _VMEM_LIMIT_CACHE.append(lim)
    return _VMEM_LIMIT_CACHE[0]


# --------------------- fused pool + BN/ReLU + conv kernel --------------------- #
def _conv_fused_kernel(x_ref, w_ref, b_ref, scale_ref, shift_ref,
                       y_ref, stat_ref, xp_ref, im_ref,
                       *, do_pool, apply_bn, H, W, Cin, Cout):
    if do_pool:
        # 2x2 stride-2 max-pool fused into the conv input path (pooled tensor
        # never hits HBM).  Column pairs via sublane-strided loads, row pairs
        # via a layout-free leading-dim split.
        xe = x_ref[:, :, pl.ds(0, W, 2), :]              # (1, 2H, W, Cin) even cols
        xo = x_ref[:, :, pl.ds(1, W, 2), :]              # (1, 2H, W, Cin) odd cols
        xc = jnp.maximum(xe, xo).reshape(H, 2, W, Cin)   # split leading dims
        x = jnp.maximum(xc[:, 0], xc[:, 1])              # (H, W, Cin)
    else:
        x = x_ref[0]                                     # (H, W, Cin), maybe bf16
    x = x.astype(jnp.float32)

    if apply_bn:
        # Previous layer's BatchNorm(train) + ReLU applied on the fly (saves a
        # full HBM round trip per layer).  f32 epilogue (no bf16 VPU on v5e).
        x = jnp.maximum(x * scale_ref[...] + shift_ref[...], 0.0)

    # 1-pixel zero halo in VMEM scratch.  Zero ONLY the border each iteration
    # (O((H+W)*Cin) stores), never gate it on program_id (megacore-safe).
    zrow = jnp.zeros((1, W + 2, Cin), jnp.float32)
    zcol = jnp.zeros((H + 2, 1, Cin), jnp.float32)
    xp_ref[0:1, 0:W + 2, :] = zrow
    xp_ref[H + 1:H + 2, 0:W + 2, :] = zrow
    xp_ref[0:H + 2, 0:1, :] = zcol
    xp_ref[0:H + 2, W + 1:W + 2, :] = zcol
    xp_ref[1:H + 1, 1:W + 1, :] = x

    # im2col staging directly in bf16: (H*W, 9*Cin), tap order (dy, dx, cin)
    # matching the (3, 3, Cin, Cout) -> (9*Cin, Cout) weight reshape.
    k = 0
    for dy in range(3):
        for dx in range(3):
            im_ref[:, k * Cin:(k + 1) * Cin] = (
                xp_ref[dy:dy + H, dx:dx + W, :]
                .reshape(H * W, Cin).astype(jnp.bfloat16))
            k += 1

    # One MXU matmul: bf16 inputs, f32 accumulation.
    y = jnp.dot(im_ref[...], w_ref[...], preferred_element_type=jnp.float32)
    y = y + b_ref[...]                                   # (H*W, Cout) f32

    # Partial BatchNorm statistics (from the f32 accumulator, before the bf16
    # writeback).  Tiny wrapper reduce finishes them; keeps the batch grid axis
    # 'parallel' / megacore-safe.
    stat_ref[0, 0:1, :] = jnp.sum(y, axis=0, keepdims=True)
    stat_ref[0, 1:2, :] = jnp.sum(y * y, axis=0, keepdims=True)

    # Pre-BN conv output stored in bf16 (halves inter-layer HBM traffic).
    y_ref[...] = y.reshape(1, H, W, Cout).astype(y_ref.dtype)


def conv_bn_layer(x, w, b, bn_scale, bn_shift, *, do_pool, apply_bn):
    """One fused layer step: [pool] -> [prev BN+ReLU] -> conv3x3+bias.

    Returns (pre-BN conv output y (N,H,W,Cout) bf16, partial stats (N,2,Cout) f32)."""
    N, Hin, Win, Cin = x.shape
    assert w.shape[:3] == (3, 3, Cin)
    Cout = w.shape[3]
    H, W = (Hin // 2, Win // 2) if do_pool else (Hin, Win)
    Wp = -(-(W + 2) // 8) * 8            # halo buffer W padded to sublane multiple

    w2 = w.reshape(9 * Cin, Cout).astype(jnp.bfloat16)   # im2col weight layout
    b2 = b.reshape(1, Cout).astype(jnp.float32)

    kernel = functools.partial(
        _conv_fused_kernel, do_pool=do_pool, apply_bn=apply_bn,
        H=H, W=W, Cin=Cin, Cout=Cout)

    y, stats = pl.pallas_call(
        kernel,
        grid=(N,),
        in_specs=[
            pl.BlockSpec((1, Hin, Win, Cin), lambda n: (n, 0, 0, 0)),
            pl.BlockSpec((9 * Cin, Cout), lambda n: (0, 0)),
            pl.BlockSpec((1, Cout), lambda n: (0, 0)),
            pl.BlockSpec((1, Cin), lambda n: (0, 0)),
            pl.BlockSpec((1, Cin), lambda n: (0, 0)),
        ],
        out_specs=(
            pl.BlockSpec((1, H, W, Cout), lambda n: (n, 0, 0, 0)),
            pl.BlockSpec((1, 2, Cout), lambda n: (n, 0, 0)),
        ),
        out_shape=(
            jax.ShapeDtypeStruct((N, H, W, Cout), jnp.bfloat16),
            jax.ShapeDtypeStruct((N, 2, Cout), jnp.float32),
        ),
        scratch_shapes=[
            pltpu.VMEM((H + 2, Wp, Cin), jnp.float32),    # zero-halo input
            pltpu.VMEM((H * W, 9 * Cin), jnp.bfloat16),   # bf16 im2col staging
        ],
        compiler_params=pltpu.CompilerParams(
            dimension_semantics=("parallel",),
            vmem_limit_bytes=_vmem_limit_bytes()),
    )(x, w2, b2, bn_scale, bn_shift)
    return y, stats


# ------------------- trailing BatchNorm + ReLU (last layer) ------------------- #
def _bn_relu_kernel(y_ref, scale_ref, shift_ref, o_ref):
    y = y_ref[...].astype(jnp.float32)
    o_ref[...] = jnp.maximum(y * scale_ref[...] + shift_ref[...], 0.0)


def bn_relu(y, scale, shift):
    N, H, W, C = y.shape
    return pl.pallas_call(
        _bn_relu_kernel,
        grid=(N,),
        in_specs=[
            pl.BlockSpec((1, H, W, C), lambda n: (n, 0, 0, 0)),
            pl.BlockSpec((1, C), lambda n: (0, 0)),
            pl.BlockSpec((1, C), lambda n: (0, 0)),
        ],
        out_specs=pl.BlockSpec((1, H, W, C), lambda n: (n, 0, 0, 0)),
        out_shape=jax.ShapeDtypeStruct((N, H, W, C), jnp.float32),
        compiler_params=pltpu.CompilerParams(
            dimension_semantics=("parallel",),
            vmem_limit_bytes=_vmem_limit_bytes()),
    )(y, scale, shift)


# ---------------------------------- DownBlock --------------------------------- #
def _bn_scale_shift(stats, gamma, beta, count):
    # stats: (N, 2, C) partial [sum; sum-of-squares]; tiny (2, C) reduce.
    tot = jnp.sum(stats, axis=0)
    mean = tot[0] / count
    var = jnp.maximum(tot[1] / count - mean * mean, 0.0)   # clamp: f32 cancellation
    inv = jax.lax.rsqrt(var + EPS)
    scale = gamma * inv
    shift = beta - mean * scale
    c = gamma.shape[0]
    return scale.reshape(1, c), shift.reshape(1, c)


def down_block(x_nchw, params):
    # x_nchw: (N, Cin, H, W) -- PyTorch DownBlock input convention.
    x = jnp.transpose(x_nchw, (0, 2, 3, 1))          # NCHW -> NHWC (layout glue)
    N, Hin, Win, Cin = x.shape
    assert Hin % 2 == 0 and Win % 2 == 0
    count = N * (Hin // 2) * (Win // 2)              # BN reduce count per channel

    scale = jnp.ones((1, Cin), jnp.float32)          # unused on the first layer
    shift = jnp.zeros((1, Cin), jnp.float32)
    cur = x
    for li, (w, b, gamma, beta) in enumerate(params):
        cur, stats = conv_bn_layer(cur, w, b, scale, shift,
                                   do_pool=(li == 0), apply_bn=(li > 0))
        scale, shift = _bn_scale_shift(stats, gamma, beta, count)
    out = bn_relu(cur, scale, shift)                 # last layer's BN + ReLU (f32 out)
    return jnp.transpose(out, (0, 3, 1, 2))          # NHWC -> NCHW


# --------------------------------- test setup ---------------------------------- #
def init_params(key, in_channels, out_channels, nb_conv):
    params = []
    cin = in_channels
    for _ in range(nb_conv):
        cout = out_channels
        key, k1, k2, k3, k4 = jax.random.split(key, 5)
        w = jax.random.normal(k1, (3, 3, cin, cout), jnp.float32) / jnp.sqrt(9.0 * cin)
        b = 0.1 * jax.random.normal(k2, (cout,), jnp.float32)
        gamma = 1.0 + 0.1 * jax.random.normal(k3, (cout,), jnp.float32)
        beta = 0.1 * jax.random.normal(k4, (cout,), jnp.float32)
        params.append((w, b, gamma, beta))
        cin = cout
    return params


def ref_down_block(x_nchw, params):
    # Pure-JAX f32 reference matching the PyTorch module semantics.
    x = jnp.transpose(x_nchw, (0, 2, 3, 1))
    N, H, W, C = x.shape
    x = jnp.max(x.reshape(N, H // 2, 2, W // 2, 2, C), axis=(2, 4))
    for (w, b, gamma, beta) in params:
        y = jax.lax.conv_general_dilated(
            x, w, window_strides=(1, 1), padding="SAME",
            dimension_numbers=("NHWC", "HWIO", "NHWC")) + b
        mean = jnp.mean(y, axis=(0, 1, 2))
        var = jnp.mean((y - mean) ** 2, axis=(0, 1, 2))
        x = jnp.maximum((y - mean) * jax.lax.rsqrt(var + EPS) * gamma + beta, 0.0)
    return jnp.transpose(x, (0, 3, 1, 2))


if __name__ == "__main__":
    key = jax.random.PRNGKey(0)
    key, kx = jax.random.split(key)
    N, Cin, H, W = 2, 4, 16, 16
    Cout, nb_conv = 8, 2

    x = jax.random.normal(kx, (N, Cin, H, W), jnp.float32)
    params = init_params(key, Cin, Cout, nb_conv)

    out = jax.jit(down_block)(x, params)
    out = jax.block_until_ready(out)
    assert out.shape == (N, Cout, H // 2, W // 2), out.shape

    ref = ref_down_block(x, params)
    diff = out - ref
    rms = float(jnp.sqrt(jnp.mean(diff * diff)))
    mx = float(jnp.max(jnp.abs(diff)))
    # bf16 MXU matmuls + bf16 inter-layer activations (f32 accumulation / BN math)
    # through two conv+BN layers: expected rms ~1e-2, max ~4e-2 at these shapes.
    assert rms < 2.5e-2, f"rms err {rms}"
    assert mx < 1.2e-1, f"max abs err {mx}"
    print("KERNEL_OK")
</pallas_src>

<mosaic_0001>
module attributes {stable_mosaic.version = 11 : i64} {
  func.func @_bn_relu_kernel(%arg0: i32, %arg1: memref<1x8x8x8xbf16, #tpu.memory_space<vmem>>, %arg2: memref<1x8xf32, #tpu.memory_space<vmem>>, %arg3: memref<1x8xf32, #tpu.memory_space<vmem>>, %arg4: memref<1x8x8x8xf32, #tpu.memory_space<vmem>>) attributes {dimension_semantics = [#tpu.dimension_semantics<parallel>], iteration_bounds = array<i64: 2>, scalar_prefetch = 0 : i64, scratch_operands = 0 : i64, tpu.core_type = #tpu.core_type<tc>, window_params = [{transform_indices = @transform_0, window_bounds = array<i64: 1, 8, 8, 8>}, {pipeline_mode = #tpu.pipeline_mode<synchronous>, transform_indices = @transform_1, window_bounds = array<i64: 1, 8>}, {pipeline_mode = #tpu.pipeline_mode<synchronous>, transform_indices = @transform_2, window_bounds = array<i64: 1, 8>}, {transform_indices = @transform_3, window_bounds = array<i64: 1, 8, 8, 8>}]} {
    %c0 = arith.constant 0 : index
    %c0_0 = arith.constant 0 : index
    %c0_1 = arith.constant 0 : index
    %c0_2 = arith.constant 0 : index
    %0 = vector.load %arg1[%c0, %c0_0, %c0_1, %c0_2] : memref<1x8x8x8xbf16, #tpu.memory_space<vmem>>, vector<1x8x8x8xbf16>
    %1 = arith.extf %0 : vector<1x8x8x8xbf16> to vector<1x8x8x8xf32>
    %c0_3 = arith.constant 0 : index
    %c0_4 = arith.constant 0 : index
    %2 = vector.load %arg2[%c0_3, %c0_4] : memref<1x8xf32, #tpu.memory_space<vmem>>, vector<1x8xf32>
    %3 = vector.shape_cast %2 : vector<1x8xf32> to vector<1x1x1x8xf32>
    %4 = vector.broadcast %3 : vector<1x1x1x8xf32> to vector<1x8x8x8xf32>
    %5 = arith.mulf %1, %4 : vector<1x8x8x8xf32>
    %c0_5 = arith.constant 0 : index
    %c0_6 = arith.constant 0 : index
    %6 = vector.load %arg3[%c0_5, %c0_6] : memref<1x8xf32, #tpu.memory_space<vmem>>, vector<1x8xf32>
    %7 = vector.shape_cast %6 : vector<1x8xf32> to vector<1x1x1x8xf32>
    %8 = vector.broadcast %7 : vector<1x1x1x8xf32> to vector<1x8x8x8xf32>
    %9 = arith.addf %5, %8 : vector<1x8x8x8xf32>
    %cst = arith.constant 0.000000e+00 : f32
    %10 = vector.broadcast %cst : f32 to vector<1x8x8x8xf32>
    %11 = arith.maximumf %9, %10 : vector<1x8x8x8xf32>
    %c0_7 = arith.constant 0 : index
    %c0_8 = arith.constant 0 : index
    %c0_9 = arith.constant 0 : index
    %c0_10 = arith.constant 0 : index
    %12 = vector.load %arg4[%c0_7, %c0_8, %c0_9, %c0_10] : memref<1x8x8x8xf32, #tpu.memory_space<vmem>>, vector<1x8x8x8xf32>
    tpu.vector_store %arg4[%c0_7, %c0_8, %c0_9, %c0_10], %11 {strides = array<i32>} : memref<1x8x8x8xf32, #tpu.memory_space<vmem>>, vector<1x8x8x8xf32>,
    return
  }
  func.func @transform_0(%arg0: i32) -> (i32, i32, i32, i32) {
    %c0_i32 = arith.constant 0 : i32
    %c0_i32_0 = arith.constant 0 : i32
    %c0_i32_1 = arith.constant 0 : i32
    %c0_i32_2 = arith.constant 0 : i32
    return %arg0, %c0_i32, %c0_i32_0, %c0_i32_1 : i32, i32, i32, i32
  }
  func.func @transform_1(%arg0: i32) -> (i32, i32) {
    %c0_i32 = arith.constant 0 : i32
    %c0_i32_0 = arith.constant 0 : i32
    %c0_i32_1 = arith.constant 0 : i32
    return %c0_i32, %c0_i32_0 : i32, i32
  }
  func.func @transform_2(%arg0: i32) -> (i32, i32) {
    %c0_i32 = arith.constant 0 : i32
    %c0_i32_0 = arith.constant 0 : i32
    %c0_i32_1 = arith.constant 0 : i32
    return %c0_i32, %c0_i32_0 : i32, i32
  }
  func.func @transform_3(%arg0: i32) -> (i32, i32, i32, i32) {
    %c0_i32 = arith.constant 0 : i32
    %c0_i32_0 = arith.constant 0 : i32
    %c0_i32_1 = arith.constant 0 : i32
    %c0_i32_2 = arith.constant 0 : i32
    return %arg0, %c0_i32, %c0_i32_0, %c0_i32_1 : i32, i32, i32, i32
  }
}

module attributes {stable_mosaic.version = 11 : i64} {
  func.func @_conv_fused_kernel(%arg0: i32, %arg1: memref<1x16x16x4xf32, #tpu.memory_space<vmem>>, %arg2: memref<36x8xbf16, #tpu.memory_space<vmem>>, %arg3: memref<1x8xf32, #tpu.memory_space<vmem>>, %arg4: memref<1x4xf32, #tpu.memory_space<vmem>>, %arg5: memref<1x4xf32, #tpu.memory_space<vmem>>, %arg6: memref<1x8x8x8xbf16, #tpu.memory_space<vmem>>, %arg7: memref<1x2x8xf32, #tpu.memory_space<vmem>>, %arg8: memref<10x16x4xf32, #tpu.memory_space<vmem>>, %arg9: memref<64x36xbf16, #tpu.memory_space<vmem>>) attributes {dimension_semantics = [#tpu.dimension_semantics<parallel>], iteration_bounds = array<i64: 2>, scalar_prefetch = 0 : i64, scratch_operands = 2 : i64, tpu.core_type = #tpu.core_type<tc>, window_params = [{transform_indices = @transform_0, window_bounds = array<i64: 1, 16, 16, 4>}, {pipeline_mode = #tpu.pipeline_mode<synchronous>, transform_indices = @transform_1, window_bounds = array<i64: 36, 8>}, {pipeline_mode = #tpu.pipeline_mode<synchronous>, transform_indices = @transform_2, window_bounds = array<i64: 1, 8>}, {pipeline_mode = #tpu.pipeline_mode<synchronous>, transform_indices = @transform_3, window_bounds = array<i64: 1, 4>}, {pipeline_mode = #tpu.pipeline_mode<synchronous>, transform_indices = @transform_4, window_bounds = array<i64: 1, 4>}, {transform_indices = @transform_5, window_bounds = array<i64: 1, 8, 8, 8>}, {transform_indices = @transform_6, window_bounds = array<i64: 1, 2, 8>}]} {
    %c0 = arith.constant 0 : index
    %c0_0 = arith.constant 0 : index
    %c0_1 = arith.constant 0 : index
    %c0_2 = arith.constant 0 : index
    %0 = tpu.strided_load %arg1[%c0, %c0_0, %c0_1, %c0_2] {strides = array<i32: 1, 1, 2, 1>} : memref<1x16x16x4xf32, #tpu.memory_space<vmem>>, vector<1x16x8x4xf32>
    %c0_3 = arith.constant 0 : index
    %c0_4 = arith.constant 0 : index
    %c1 = arith.constant 1 : index
    %c0_5 = arith.constant 0 : index
    %1 = tpu.strided_load %arg1[%c0_3, %c0_4, %c1, %c0_5] {strides = array<i32: 1, 1, 2, 1>} : memref<1x16x16x4xf32, #tpu.memory_space<vmem>>, vector<1x16x8x4xf32>
    %2 = arith.maximumf %0, %1 : vector<1x16x8x4xf32>
    %3 = vector.shape_cast %2 : vector<1x16x8x4xf32> to vector<8x2x8x4xf32>
    %4 = vector.extract_strided_slice %3 {offsets = [0, 0, 0, 0], sizes = [8, 1, 8, 4], strides = [1, 1, 1, 1]} : vector<8x2x8x4xf32> to vector<8x1x8x4xf32>
    %5 = vector.shape_cast %4 : vector<8x1x8x4xf32> to vector<8x8x4xf32>
    %6 = vector.extract_strided_slice %3 {offsets = [0, 1, 0, 0], sizes = [8, 1, 8, 4], strides = [1, 1, 1, 1]} : vector<8x2x8x4xf32> to vector<8x1x8x4xf32>
    %7 = vector.shape_cast %6 : vector<8x1x8x4xf32> to vector<8x8x4xf32>
    %8 = arith.maximumf %5, %7 : vector<8x8x4xf32>
    %cst = arith.constant 0.000000e+00 : f32
    %9 = vector.broadcast %cst : f32 to vector<1x10x4xf32>
    %cst_6 = arith.constant 0.000000e+00 : f32
    %10 = vector.broadcast %cst_6 : f32 to vector<10x1x4xf32>
    %c0_7 = arith.constant 0 : index
    %c0_8 = arith.constant 0 : index
    %c0_9 = arith.constant 0 : index
    %11 = vector.load %arg8[%c0_7, %c0_8, %c0_9] : memref<10x16x4xf32, #tpu.memory_space<vmem>>, vector<1x10x4xf32>
    tpu.vector_store %arg8[%c0_7, %c0_8, %c0_9], %9 {strides = array<i32>} : memref<10x16x4xf32, #tpu.memory_space<vmem>>, vector<1x10x4xf32>,
    %c9 = arith.constant 9 : index
    %c0_10 = arith.constant 0 : index
    %c0_11 = arith.constant 0 : index
    %12 = vector.load %arg8[%c9, %c0_10, %c0_11] : memref<10x16x4xf32, #tpu.memory_space<vmem>>, vector<1x10x4xf32>
    tpu.vector_store %arg8[%c9, %c0_10, %c0_11], %9 {strides = array<i32>} : memref<10x16x4xf32, #tpu.memory_space<vmem>>, vector<1x10x4xf32>,
    %c0_12 = arith.constant 0 : index
    %c0_13 = arith.constant 0 : index
    %c0_14 = arith.constant 0 : index
    %13 = vector.load %arg8[%c0_12, %c0_13, %c0_14] : memref<10x16x4xf32, #tpu.memory_space<vmem>>, vector<10x1x4xf32>
    tpu.vector_store %arg8[%c0_12, %c0_13, %c0_14], %10 {strides = array<i32>} : memref<10x16x4xf32, #tpu.memory_space<vmem>>, vector<10x1x4xf32>,
    %c0_15 = arith.constant 0 : index
    %c9_16 = arith.constant 9 : index
    %c0_17 = arith.constant 0 : index
    %14 = vector.load %arg8[%c0_15, %c9_16, %c0_17] : memref<10x16x4xf32, #tpu.memory_space<vmem>>, vector<10x1x4xf32>
    tpu.vector_store %arg8[%c0_15, %c9_16, %c0_17], %10 {strides = array<i32>} : memref<10x16x4xf32, #tpu.memory_space<vmem>>, vector<10x1x4xf32>,
    %c1_18 = arith.constant 1 : index
    %c1_19 = arith.constant 1 : index
    %c0_20 = arith.constant 0 : index
    %15 = vector.load %arg8[%c1_18, %c1_19, %c0_20] : memref<10x16x4xf32, #tpu.memory_space<vmem>>, vector<8x8x4xf32>
    tpu.vector_store %arg8[%c1_18, %c1_19, %c0_20], %8 {strides = array<i32>} : memref<10x16x4xf32, #tpu.memory_space<vmem>>, vector<8x8x4xf32>,
    %c0_21 = arith.constant 0 : index
    %c0_22 = arith.constant 0 : index
    %c0_23 = arith.constant 0 : index
    %16 = vector.load %arg8[%c0_21, %c0_22, %c0_23] : memref<10x16x4xf32, #tpu.memory_space<vmem>>, vector<8x8x4xf32>
    %17 = vector.shape_cast %16 : vector<8x8x4xf32> to vector<64x4xf32>
    %18 = arith.truncf %17 : vector<64x4xf32> to vector<64x4xbf16>
    %c0_24 = arith.constant 0 : index
    %c0_25 = arith.constant 0 : index
    %19 = vector.load %arg9[%c0_24, %c0_25] : memref<64x36xbf16, #tpu.memory_space<vmem>>, vector<64x4xbf16>
    tpu.vector_store %arg9[%c0_24, %c0_25], %18 {strides = array<i32>} : memref<64x36xbf16, #tpu.memory_space<vmem>>, vector<64x4xbf16>,
    %c0_26 = arith.constant 0 : index
    %c1_27 = arith.constant 1 : index
    %c0_28 = arith.constant 0 : index
    %20 = vector.load %arg8[%c0_26, %c1_27, %c0_28] : memref<10x16x4xf32, #tpu.memory_space<vmem>>, vector<8x8x4xf32>
    %21 = vector.shape_cast %20 : vector<8x8x4xf32> to vector<64x4xf32>
    %22 = arith.truncf %21 : vector<64x4xf32> to vector<64x4xbf16>
    %c0_29 = arith.constant 0 : index
    %c4 = arith.constant 4 : index
    %23 = vector.load %arg9[%c0_29, %c4] : memref<64x36xbf16, #tpu.memory_space<vmem>>, vector<64x4xbf16>
    tpu.vector_store %arg9[%c0_29, %c4], %22 {strides = array<i32>} : memref<64x36xbf16, #tpu.memory_space<vmem>>, vector<64x4xbf16>,
    %c0_30 = arith.constant 0 : index
    %c2 = arith.constant 2 : index
    %c0_31 = arith.constant 0 : index
    %24 = vector.load %arg8[%c0_30, %c2, %c0_31] : memref<10x16x4xf32, #tpu.memory_space<vmem>>, vector<8x8x4xf32>
    %25 = vector.shape_cast %24 : vector<8x8x4xf32> to vector<64x4xf32>
    %26 = arith.truncf %25 : vector<64x4xf32> to vector<64x4xbf16>
    %c0_32 = arith.constant 0 : index
    %c8 = arith.constant 8 : index
    %27 = vector.load %arg9[%c0_32, %c8] : memref<64x36xbf16, #tpu.memory_space<vmem>>, vector<64x4xbf16>
    tpu.vector_store %arg9[%c0_32, %c8], %26 {strides = array<i32>} : memref<64x36xbf16, #tpu.memory_space<vmem>>, vector<64x4xbf16>,
    %c1_33 = arith.constant 1 : index
    %c0_34 = arith.constant 0 : index
    %c0_35 = arith.constant 0 : index
    %28 = vector.load %arg8[%c1_33, %c0_34, %c0_35] : memref<10x16x4xf32, #tpu.memory_space<vmem>>, vector<8x8x4xf32>
    %29 = vector.shape_cast %28 : vector<8x8x4xf32> to vector<64x4xf32>
    %30 = arith.truncf %29 : vector<64x4xf32> to vector<64x4xbf16>
    %c0_36 = arith.constant 0 : index
    %c12 = arith.constant 12 : index
    %31 = vector.load %arg9[%c0_36, %c12] : memref<64x36xbf16, #tpu.memory_space<vmem>>, vector<64x4xbf16>
    tpu.vector_store %arg9[%c0_36, %c12], %30 {strides = array<i32>} : memref<64x36xbf16, #tpu.memory_space<vmem>>, vector<64x4xbf16>,
    %c1_37 = arith.constant 1 : index
    %c1_38 = arith.constant 1 : index
    %c0_39 = arith.constant 0 : index
    %32 = vector.load %arg8[%c1_37, %c1_38, %c0_39] : memref<10x16x4xf32, #tpu.memory_space<vmem>>, vector<8x8x4xf32>
    %33 = vector.shape_cast %32 : vector<8x8x4xf32> to vector<64x4xf32>
    %34 = arith.truncf %33 : vector<64x4xf32> to vector<64x4xbf16>
    %c0_40 = arith.constant 0 : index
    %c16 = arith.constant 16 : index
    %35 = vector.load %arg9[%c0_40, %c16] : memref<64x36xbf16, #tpu.memory_space<vmem>>, vector<64x4xbf16>
    tpu.vector_store %arg9[%c0_40, %c16], %34 {strides = array<i32>} : memref<64x36xbf16, #tpu.memory_space<vmem>>, vector<64x4xbf16>,
    %c1_41 = arith.constant 1 : index
    %c2_42 = arith.constant 2 : index
    %c0_43 = arith.constant 0 : index
    %36 = vector.load %arg8[%c1_41, %c2_42, %c0_43] : memref<10x16x4xf32, #tpu.memory_space<vmem>>, vector<8x8x4xf32>
    %37 = vector.shape_cast %36 : vector<8x8x4xf32> to vector<64x4xf32>
    %38 = arith.truncf %37 : vector<64x4xf32> to vector<64x4xbf16>
    %c0_44 = arith.constant 0 : index
    %c20 = arith.constant 20 : index
    %39 = vector.load %arg9[%c0_44, %c20] : memref<64x36xbf16, #tpu.memory_space<vmem>>, vector<64x4xbf16>
    tpu.vector_store %arg9[%c0_44, %c20], %38 {strides = array<i32>} : memref<64x36xbf16, #tpu.memory_space<vmem>>, vector<64x4xbf16>,
    %c2_45 = arith.constant 2 : index
    %c0_46 = arith.constant 0 : index
    %c0_47 = arith.constant 0 : index
    %40 = vector.load %arg8[%c2_45, %c0_46, %c0_47] : memref<10x16x4xf32, #tpu.memory_space<vmem>>, vector<8x8x4xf32>
    %41 = vector.shape_cast %40 : vector<8x8x4xf32> to vector<64x4xf32>
    %42 = arith.truncf %41 : vector<64x4xf32> to vector<64x4xbf16>
    %c0_48 = arith.constant 0 : index
    %c24 = arith.constant 24 : index
    %43 = vector.load %arg9[%c0_48, %c24] : memref<64x36xbf16, #tpu.memory_space<vmem>>, vector<64x4xbf16>
    tpu.vector_store %arg9[%c0_48, %c24], %42 {strides = array<i32>} : memref<64x36xbf16, #tpu.memory_space<vmem>>, vector<64x4xbf16>,
    %c2_49 = arith.constant 2 : index
    %c1_50 = arith.constant 1 : index
    %c0_51 = arith.constant 0 : index
    %44 = vector.load %arg8[%c2_49, %c1_50, %c0_51] : memref<10x16x4xf32, #tpu.memory_space<vmem>>, vector<8x8x4xf32>
    %45 = vector.shape_cast %44 : vector<8x8x4xf32> to vector<64x4xf32>
    %46 = arith.truncf %45 : vector<64x4xf32> to vector<64x4xbf16>
    %c0_52 = arith.constant 0 : index
    %c28 = arith.constant 28 : index
    %47 = vector.load %arg9[%c0_52, %c28] : memref<64x36xbf16, #tpu.memory_space<vmem>>, vector<64x4xbf16>
    tpu.vector_store %arg9[%c0_52, %c28], %46 {strides = array<i32>} : memref<64x36xbf16, #tpu.memory_space<vmem>>, vector<64x4xbf16>,
    %c2_53 = arith.constant 2 : index
    %c2_54 = arith.constant 2 : index
    %c0_55 = arith.constant 0 : index
    %48 = vector.load %arg8[%c2_53, %c2_54, %c0_55] : memref<10x16x4xf32, #tpu.memory_space<vmem>>, vector<8x8x4xf32>
    %49 = vector.shape_cast %48 : vector<8x8x4xf32> to vector<64x4xf32>
    %50 = arith.truncf %49 : vector<64x4xf32> to vector<64x4xbf16>
    %c0_56 = arith.constant 0 : index
    %c32 = arith.constant 32 : index
    %51 = vector.load %arg9[%c0_56, %c32] : memref<64x36xbf16, #tpu.memory_space<vmem>>, vector<64x4xbf16>
    tpu.vector_store %arg9[%c0_56, %c32], %50 {strides = array<i32>} : memref<64x36xbf16, #tpu.memory_space<vmem>>, vector<64x4xbf16>,
    %c0_57 = arith.constant 0 : index
    %c0_58 = arith.constant 0 : index
    %52 = vector.load %arg9[%c0_57, %c0_58] : memref<64x36xbf16, #tpu.memory_space<vmem>>, vector<64x36xbf16>
    %c0_59 = arith.constant 0 : index
    %c0_60 = arith.constant 0 : index
    %53 = vector.load %arg2[%c0_59, %c0_60] : memref<36x8xbf16, #tpu.memory_space<vmem>>, vector<36x8xbf16>
    %cst_61 = arith.constant dense<0.000000e+00> : vector<64x8xf32>
    %54 = tpu.matmul %52, %53, %cst_61 {dimension_numbers = #tpu.dot_dimension_numbers<[1], [0], [0], [1], [0, 0, 1, 1], [], []>} : vector<64x36xbf16>, vector<36x8xbf16>, vector<64x8xf32> -> vector<64x8xf32>
    %c0_62 = arith.constant 0 : index
    %c0_63 = arith.constant 0 : index
    %55 = vector.load %arg3[%c0_62, %c0_63] : memref<1x8xf32, #tpu.memory_space<vmem>>, vector<1x8xf32>
    %56 = vector.broadcast %55 : vector<1x8xf32> to vector<64x8xf32>
    %57 = arith.addf %54, %56 : vector<64x8xf32>
    %cst_64 = arith.constant dense<0.000000e+00> : vector<8xf32>
    %58 = vector.multi_reduction <add>, %57, %cst_64 [0] : vector<64x8xf32> to vector<8xf32>
    %59 = vector.shape_cast %58 : vector<8xf32> to vector<1x8xf32>
    %c0_65 = arith.constant 0 : index
    %c0_66 = arith.constant 0 : index
    %c0_67 = arith.constant 0 : index
    %60 = vector.load %arg7[%c0_65, %c0_66, %c0_67] : memref<1x2x8xf32, #tpu.memory_space<vmem>>, vector<1x1x8xf32>
    %61 = vector.shape_cast %60 : vector<1x1x8xf32> to vector<1x8xf32>
    %62 = vector.shape_cast %59 : vector<1x8xf32> to vector<1x1x8xf32>
    tpu.vector_store %arg7[%c0_65, %c0_66, %c0_67], %62 {strides = array<i32>} : memref<1x2x8xf32, #tpu.memory_space<vmem>>, vector<1x1x8xf32>,
    %63 = arith.mulf %57, %57 : vector<64x8xf32>
    %cst_68 = arith.constant dense<0.000000e+00> : vector<8xf32>
    %64 = vector.multi_reduction <add>, %63, %cst_68 [0] : vector<64x8xf32> to vector<8xf32>
    %65 = vector.shape_cast %64 : vector<8xf32> to vector<1x8xf32>
    %c0_69 = arith.constant 0 : index
    %c1_70 = arith.constant 1 : index
    %c0_71 = arith.constant 0 : index
    %66 = vector.load %arg7[%c0_69, %c1_70, %c0_71] : memref<1x2x8xf32, #tpu.memory_space<vmem>>, vector<1x1x8xf32>
    %67 = vector.shape_cast %66 : vector<1x1x8xf32> to vector<1x8xf32>
    %68 = vector.shape_cast %65 : vector<1x8xf32> to vector<1x1x8xf32>
    tpu.vector_store %arg7[%c0_69, %c1_70, %c0_71], %68 {strides = array<i32>} : memref<1x2x8xf32, #tpu.memory_space<vmem>>, vector<1x1x8xf32>,
    %69 = vector.shape_cast %57 : vector<64x8xf32> to vector<1x8x8x8xf32>
    %70 = arith.truncf %69 : vector<1x8x8x8xf32> to vector<1x8x8x8xbf16>
    %c0_72 = arith.constant 0 : index
    %c0_73 = arith.constant 0 : index
    %c0_74 = arith.constant 0 : index
    %c0_75 = arith.constant 0 : index
    %71 = vector.load %arg6[%c0_72, %c0_73, %c0_74, %c0_75] : memref<1x8x8x8xbf16, #tpu.memory_space<vmem>>, vector<1x8x8x8xbf16>
    tpu.vector_store %arg6[%c0_72, %c0_73, %c0_74, %c0_75], %70 {strides = array<i32>} : memref<1x8x8x8xbf16, #tpu.memory_space<vmem>>, vector<1x8x8x8xbf16>,
    return
  }
  func.func @transform_0(%arg0: i32) -> (i32, i32, i32, i32) {
    %c0_i32 = arith.constant 0 : i32
    %c0_i32_0 = arith.constant 0 : i32
    %c0_i32_1 = arith.constant 0 : i32
    %c0_i32_2 = arith.constant 0 : i32
    return %arg0, %c0_i32, %c0_i32_0, %c0_i32_1 : i32, i32, i32, i32
  }
  func.func @transform_1(%arg0: i32) -> (i32, i32) {
    %c0_i32 = arith.constant 0 : i32
    %c0_i32_0 = arith.constant 0 : i32
    %c0_i32_1 = arith.constant 0 : i32
    return %c0_i32, %c0_i32_0 : i32, i32
  }
  func.func @transform_2(%arg0: i32) -> (i32, i32) {
    %c0_i32 = arith.constant 0 : i32
    %c0_i32_0 = arith.constant 0 : i32
    %c0_i32_1 = arith.constant 0 : i32
    return %c0_i32, %c0_i32_0 : i32, i32
  }
  func.func @transform_3(%arg0: i32) -> (i32, i32) {
    %c0_i32 = arith.constant 0 : i32
    %c0_i32_0 = arith.constant 0 : i32
    %c0_i32_1 = arith.constant 0 : i32
    return %c0_i32, %c0_i32_0 : i32, i32
  }
  func.func @transform_4(%arg0: i32) -> (i32, i32) {
    %c0_i32 = arith.constant 0 : i32
    %c0_i32_0 = arith.constant 0 : i32
    %c0_i32_1 = arith.constant 0 : i32
    return %c0_i32, %c0_i32_0 : i32, i32
  }
  func.func @transform_5(%arg0: i32) -> (i32, i32, i32, i32) {
    %c0_i32 = arith.constant 0 : i32
    %c0_i32_0 = arith.constant 0 : i32
    %c0_i32_1 = arith.constant 0 : i32
    %c0_i32_2 = arith.constant 0 : i32
    return %arg0, %c0_i32, %c0_i32_0, %c0_i32_1 : i32, i32, i32, i32
  }
  func.func @transform_6(%arg0: i32) -> (i32, i32, i32) {
    %c0_i32 = arith.constant 0 : i32
    %c0_i32_0 = arith.constant 0 : i32
    %c0_i32_1 = arith.constant 0 : i32
    return %arg0, %c0_i32, %c0_i32_0 : i32, i32, i32
  }
}

module attributes {stable_mosaic.version = 11 : i64} {
  func.func @_conv_fused_kernel(%arg0: i32, %arg1: memref<1x8x8x8xbf16, #tpu.memory_space<vmem>>, %arg2: memref<72x8xbf16, #tpu.memory_space<vmem>>, %arg3: memref<1x8xf32, #tpu.memory_space<vmem>>, %arg4: memref<1x8xf32, #tpu.memory_space<vmem>>, %arg5: memref<1x8xf32, #tpu.memory_space<vmem>>, %arg6: memref<1x8x8x8xbf16, #tpu.memory_space<vmem>>, %arg7: memref<1x2x8xf32, #tpu.memory_space<vmem>>, %arg8: memref<10x16x8xf32, #tpu.memory_space<vmem>>, %arg9: memref<64x72xbf16, #tpu.memory_space<vmem>>) attributes {dimension_semantics = [#tpu.dimension_semantics<parallel>], iteration_bounds = array<i64: 2>, scalar_prefetch = 0 : i64, scratch_operands = 2 : i64, tpu.core_type = #tpu.core_type<tc>, window_params = [{transform_indices = @transform_0, window_bounds = array<i64: 1, 8, 8, 8>}, {pipeline_mode = #tpu.pipeline_mode<synchronous>, transform_indices = @transform_1, window_bounds = array<i64: 72, 8>}, {pipeline_mode = #tpu.pipeline_mode<synchronous>, transform_indices = @transform_2, window_bounds = array<i64: 1, 8>}, {pipeline_mode = #tpu.pipeline_mode<synchronous>, transform_indices = @transform_3, window_bounds = array<i64: 1, 8>}, {pipeline_mode = #tpu.pipeline_mode<synchronous>, transform_indices = @transform_4, window_bounds = array<i64: 1, 8>}, {transform_indices = @transform_5, window_bounds = array<i64: 1, 8, 8, 8>}, {transform_indices = @transform_6, window_bounds = array<i64: 1, 2, 8>}]} {
    %c0 = arith.constant 0 : index
    %c0_0 = arith.constant 0 : index
    %c0_1 = arith.constant 0 : index
    %c0_2 = arith.constant 0 : index
    %0 = vector.load %arg1[%c0, %c0_0, %c0_1, %c0_2] : memref<1x8x8x8xbf16, #tpu.memory_space<vmem>>, vector<1x8x8x8xbf16>
    %1 = vector.shape_cast %0 : vector<1x8x8x8xbf16> to vector<8x8x8xbf16>
    %2 = arith.extf %1 : vector<8x8x8xbf16> to vector<8x8x8xf32>
    %c0_3 = arith.constant 0 : index
    %c0_4 = arith.constant 0 : index
    %3 = vector.load %arg4[%c0_3, %c0_4] : memref<1x8xf32, #tpu.memory_space<vmem>>, vector<1x8xf32>
    %4 = vector.shape_cast %3 : vector<1x8xf32> to vector<1x1x8xf32>
    %5 = vector.broadcast %4 : vector<1x1x8xf32> to vector<8x8x8xf32>
    %6 = arith.mulf %2, %5 : vector<8x8x8xf32>
    %c0_5 = arith.constant 0 : index
    %c0_6 = arith.constant 0 : index
    %7 = vector.load %arg5[%c0_5, %c0_6] : memref<1x8xf32, #tpu.memory_space<vmem>>, vector<1x8xf32>
    %8 = vector.shape_cast %7 : vector<1x8xf32> to vector<1x1x8xf32>
    %9 = vector.broadcast %8 : vector<1x1x8xf32> to vector<8x8x8xf32>
    %10 = arith.addf %6, %9 : vector<8x8x8xf32>
    %cst = arith.constant 0.000000e+00 : f32
    %11 = vector.broadcast %cst : f32 to vector<8x8x8xf32>
    %12 = arith.maximumf %10, %11 : vector<8x8x8xf32>
    %cst_7 = arith.constant 0.000000e+00 : f32
    %13 = vector.broadcast %cst_7 : f32 to vector<1x10x8xf32>
    %cst_8 = arith.constant 0.000000e+00 : f32
    %14 = vector.broadcast %cst_8 : f32 to vector<10x1x8xf32>
    %c0_9 = arith.constant 0 : index
    %c0_10 = arith.constant 0 : index
    %c0_11 = arith.constant 0 : index
    %15 = vector.load %arg8[%c0_9, %c0_10, %c0_11] : memref<10x16x8xf32, #tpu.memory_space<vmem>>, vector<1x10x8xf32>
    tpu.vector_store %arg8[%c0_9, %c0_10, %c0_11], %13 {strides = array<i32>} : memref<10x16x8xf32, #tpu.memory_space<vmem>>, vector<1x10x8xf32>,
    %c9 = arith.constant 9 : index
    %c0_12 = arith.constant 0 : index
    %c0_13 = arith.constant 0 : index
    %16 = vector.load %arg8[%c9, %c0_12, %c0_13] : memref<10x16x8xf32, #tpu.memory_space<vmem>>, vector<1x10x8xf32>
    tpu.vector_store %arg8[%c9, %c0_12, %c0_13], %13 {strides = array<i32>} : memref<10x16x8xf32, #tpu.memory_space<vmem>>, vector<1x10x8xf32>,
    %c0_14 = arith.constant 0 : index
    %c0_15 = arith.constant 0 : index
    %c0_16 = arith.constant 0 : index
    %17 = vector.load %arg8[%c0_14, %c0_15, %c0_16] : memref<10x16x8xf32, #tpu.memory_space<vmem>>, vector<10x1x8xf32>
    tpu.vector_store %arg8[%c0_14, %c0_15, %c0_16], %14 {strides = array<i32>} : memref<10x16x8xf32, #tpu.memory_space<vmem>>, vector<10x1x8xf32>,
    %c0_17 = arith.constant 0 : index
    %c9_18 = arith.constant 9 : index
    %c0_19 = arith.constant 0 : index
    %18 = vector.load %arg8[%c0_17, %c9_18, %c0_19] : memref<10x16x8xf32, #tpu.memory_space<vmem>>, vector<10x1x8xf32>
    tpu.vector_store %arg8[%c0_17, %c9_18, %c0_19], %14 {strides = array<i32>} : memref<10x16x8xf32, #tpu.memory_space<vmem>>, vector<10x1x8xf32>,
    %c1 = arith.constant 1 : index
    %c1_20 = arith.constant 1 : index
    %c0_21 = arith.constant 0 : index
    %19 = vector.load %arg8[%c1, %c1_20, %c0_21] : memref<10x16x8xf32, #tpu.memory_space<vmem>>, vector<8x8x8xf32>
    tpu.vector_store %arg8[%c1, %c1_20, %c0_21], %12 {strides = array<i32>} : memref<10x16x8xf32, #tpu.memory_space<vmem>>, vector<8x8x8xf32>,
    %c0_22 = arith.constant 0 : index
    %c0_23 = arith.constant 0 : index
    %c0_24 = arith.constant 0 : index
    %20 = vector.load %arg8[%c0_22, %c0_23, %c0_24] : memref<10x16x8xf32, #tpu.memory_space<vmem>>, vector<8x8x8xf32>
    %21 = vector.shape_cast %20 : vector<8x8x8xf32> to vector<64x8xf32>
    %22 = arith.truncf %21 : vector<64x8xf32> to vector<64x8xbf16>
    %c0_25 = arith.constant 0 : index
    %c0_26 = arith.constant 0 : index
    %23 = vector.load %arg9[%c0_25, %c0_26] : memref<64x72xbf16, #tpu.memory_space<vmem>>, vector<64x8xbf16>
    tpu.vector_store %arg9[%c0_25, %c0_26], %22 {strides = array<i32>} : memref<64x72xbf16, #tpu.memory_space<vmem>>, vector<64x8xbf16>,
    %c0_27 = arith.constant 0 : index
    %c1_28 = arith.constant 1 : index
    %c0_29 = arith.constant 0 : index
    %24 = vector.load %arg8[%c0_27, %c1_28, %c0_29] : memref<10x16x8xf32, #tpu.memory_space<vmem>>, vector<8x8x8xf32>
    %25 = vector.shape_cast %24 : vector<8x8x8xf32> to vector<64x8xf32>
    %26 = arith.truncf %25 : vector<64x8xf32> to vector<64x8xbf16>
    %c0_30 = arith.constant 0 : index
    %c8 = arith.constant 8 : index
    %27 = vector.load %arg9[%c0_30, %c8] : memref<64x72xbf16, #tpu.memory_space<vmem>>, vector<64x8xbf16>
    tpu.vector_store %arg9[%c0_30, %c8], %26 {strides = array<i32>} : memref<64x72xbf16, #tpu.memory_space<vmem>>, vector<64x8xbf16>,
    %c0_31 = arith.constant 0 : index
    %c2 = arith.constant 2 : index
    %c0_32 = arith.constant 0 : index
    %28 = vector.load %arg8[%c0_31, %c2, %c0_32] : memref<10x16x8xf32, #tpu.memory_space<vmem>>, vector<8x8x8xf32>
    %29 = vector.shape_cast %28 : vector<8x8x8xf32> to vector<64x8xf32>
    %30 = arith.truncf %29 : vector<64x8xf32> to vector<64x8xbf16>
    %c0_33 = arith.constant 0 : index
    %c16 = arith.constant 16 : index
    %31 = vector.load %arg9[%c0_33, %c16] : memref<64x72xbf16, #tpu.memory_space<vmem>>, vector<64x8xbf16>
    tpu.vector_store %arg9[%c0_33, %c16], %30 {strides = array<i32>} : memref<64x72xbf16, #tpu.memory_space<vmem>>, vector<64x8xbf16>,
    %c1_34 = arith.constant 1 : index
    %c0_35 = arith.constant 0 : index
    %c0_36 = arith.constant 0 : index
    %32 = vector.load %arg8[%c1_34, %c0_35, %c0_36] : memref<10x16x8xf32, #tpu.memory_space<vmem>>, vector<8x8x8xf32>
    %33 = vector.shape_cast %32 : vector<8x8x8xf32> to vector<64x8xf32>
    %34 = arith.truncf %33 : vector<64x8xf32> to vector<64x8xbf16>
    %c0_37 = arith.constant 0 : index
    %c24 = arith.constant 24 : index
    %35 = vector.load %arg9[%c0_37, %c24] : memref<64x72xbf16, #tpu.memory_space<vmem>>, vector<64x8xbf16>
    tpu.vector_store %arg9[%c0_37, %c24], %34 {strides = array<i32>} : memref<64x72xbf16, #tpu.memory_space<vmem>>, vector<64x8xbf16>,
    %c1_38 = arith.constant 1 : index
    %c1_39 = arith.constant 1 : index
    %c0_40 = arith.constant 0 : index
    %36 = vector.load %arg8[%c1_38, %c1_39, %c0_40] : memref<10x16x8xf32, #tpu.memory_space<vmem>>, vector<8x8x8xf32>
    %37 = vector.shape_cast %36 : vector<8x8x8xf32> to vector<64x8xf32>
    %38 = arith.truncf %37 : vector<64x8xf32> to vector<64x8xbf16>
    %c0_41 = arith.constant 0 : index
    %c32 = arith.constant 32 : index
    %39 = vector.load %arg9[%c0_41, %c32] : memref<64x72xbf16, #tpu.memory_space<vmem>>, vector<64x8xbf16>
    tpu.vector_store %arg9[%c0_41, %c32], %38 {strides = array<i32>} : memref<64x72xbf16, #tpu.memory_space<vmem>>, vector<64x8xbf16>,
    %c1_42 = arith.constant 1 : index
    %c2_43 = arith.constant 2 : index
    %c0_44 = arith.constant 0 : index
    %40 = vector.load %arg8[%c1_42, %c2_43, %c0_44] : memref<10x16x8xf32, #tpu.memory_space<vmem>>, vector<8x8x8xf32>
    %41 = vector.shape_cast %40 : vector<8x8x8xf32> to vector<64x8xf32>
    %42 = arith.truncf %41 : vector<64x8xf32> to vector<64x8xbf16>
    %c0_45 = arith.constant 0 : index
    %c40 = arith.constant 40 : index
    %43 = vector.load %arg9[%c0_45, %c40] : memref<64x72xbf16, #tpu.memory_space<vmem>>, vector<64x8xbf16>
    tpu.vector_store %arg9[%c0_45, %c40], %42 {strides = array<i32>} : memref<64x72xbf16, #tpu.memory_space<vmem>>, vector<64x8xbf16>,
    %c2_46 = arith.constant 2 : index
    %c0_47 = arith.constant 0 : index
    %c0_48 = arith.constant 0 : index
    %44 = vector.load %arg8[%c2_46, %c0_47, %c0_48] : memref<10x16x8xf32, #tpu.memory_space<vmem>>, vector<8x8x8xf32>
    %45 = vector.shape_cast %44 : vector<8x8x8xf32> to vector<64x8xf32>
    %46 = arith.truncf %45 : vector<64x8xf32> to vector<64x8xbf16>
    %c0_49 = arith.constant 0 : index
    %c48 = arith.constant 48 : index
    %47 = vector.load %arg9[%c0_49, %c48] : memref<64x72xbf16, #tpu.memory_space<vmem>>, vector<64x8xbf16>
    tpu.vector_store %arg9[%c0_49, %c48], %46 {strides = array<i32>} : memref<64x72xbf16, #tpu.memory_space<vmem>>, vector<64x8xbf16>,
    %c2_50 = arith.constant 2 : index
    %c1_51 = arith.constant 1 : index
    %c0_52 = arith.constant 0 : index
    %48 = vector.load %arg8[%c2_50, %c1_51, %c0_52] : memref<10x16x8xf32, #tpu.memory_space<vmem>>, vector<8x8x8xf32>
    %49 = vector.shape_cast %48 : vector<8x8x8xf32> to vector<64x8xf32>
    %50 = arith.truncf %49 : vector<64x8xf32> to vector<64x8xbf16>
    %c0_53 = arith.constant 0 : index
    %c56 = arith.constant 56 : index
    %51 = vector.load %arg9[%c0_53, %c56] : memref<64x72xbf16, #tpu.memory_space<vmem>>, vector<64x8xbf16>
    tpu.vector_store %arg9[%c0_53, %c56], %50 {strides = array<i32>} : memref<64x72xbf16, #tpu.memory_space<vmem>>, vector<64x8xbf16>,
    %c2_54 = arith.constant 2 : index
    %c2_55 = arith.constant 2 : index
    %c0_56 = arith.constant 0 : index
    %52 = vector.load %arg8[%c2_54, %c2_55, %c0_56] : memref<10x16x8xf32, #tpu.memory_space<vmem>>, vector<8x8x8xf32>
    %53 = vector.shape_cast %52 : vector<8x8x8xf32> to vector<64x8xf32>
    %54 = arith.truncf %53 : vector<64x8xf32> to vector<64x8xbf16>
    %c0_57 = arith.constant 0 : index
    %c64 = arith.constant 64 : index
    %55 = vector.load %arg9[%c0_57, %c64] : memref<64x72xbf16, #tpu.memory_space<vmem>>, vector<64x8xbf16>
    tpu.vector_store %arg9[%c0_57, %c64], %54 {strides = array<i32>} : memref<64x72xbf16, #tpu.memory_space<vmem>>, vector<64x8xbf16>,
    %c0_58 = arith.constant 0 : index
    %c0_59 = arith.constant 0 : index
    %56 = vector.load %arg9[%c0_58, %c0_59] : memref<64x72xbf16, #tpu.memory_space<vmem>>, vector<64x72xbf16>
    %c0_60 = arith.constant 0 : index
    %c0_61 = arith.constant 0 : index
    %57 = vector.load %arg2[%c0_60, %c0_61] : memref<72x8xbf16, #tpu.memory_space<vmem>>, vector<72x8xbf16>
    %cst_62 = arith.constant dense<0.000000e+00> : vector<64x8xf32>
    %58 = tpu.matmul %56, %57, %cst_62 {dimension_numbers = #tpu.dot_dimension_numbers<[1], [0], [0], [1], [0, 0, 1, 1], [], []>} : vector<64x72xbf16>, vector<72x8xbf16>, vector<64x8xf32> -> vector<64x8xf32>
    %c0_63 = arith.constant 0 : index
    %c0_64 = arith.constant 0 : index
    %59 = vector.load %arg3[%c0_63, %c0_64] : memref<1x8xf32, #tpu.memory_space<vmem>>, vector<1x8xf32>
    %60 = vector.broadcast %59 : vector<1x8xf32> to vector<64x8xf32>
    %61 = arith.addf %58, %60 : vector<64x8xf32>
    %cst_65 = arith.constant dense<0.000000e+00> : vector<8xf32>
    %62 = vector.multi_reduction <add>, %61, %cst_65 [0] : vector<64x8xf32> to vector<8xf32>
    %63 = vector.shape_cast %62 : vector<8xf32> to vector<1x8xf32>
    %c0_66 = arith.constant 0 : index
    %c0_67 = arith.constant 0 : index
    %c0_68 = arith.constant 0 : index
    %64 = vector.load %arg7[%c0_66, %c0_67, %c0_68] : memref<1x2x8xf32, #tpu.memory_space<vmem>>, vector<1x1x8xf32>
    %65 = vector.shape_cast %64 : vector<1x1x8xf32> to vector<1x8xf32>
    %66 = vector.shape_cast %63 : vector<1x8xf32> to vector<1x1x8xf32>
    tpu.vector_store %arg7[%c0_66, %c0_67, %c0_68], %66 {strides = array<i32>} : memref<1x2x8xf32, #tpu.memory_space<vmem>>, vector<1x1x8xf32>,
    %67 = arith.mulf %61, %61 : vector<64x8xf32>
    %cst_69 = arith.constant dense<0.000000e+00> : vector<8xf32>
    %68 = vector.multi_reduction <add>, %67, %cst_69 [0] : vector<64x8xf32> to vector<8xf32>
    %69 = vector.shape_cast %68 : vector<8xf32> to vector<1x8xf32>
    %c0_70 = arith.constant 0 : index
    %c1_71 = arith.constant 1 : index
    %c0_72 = arith.constant 0 : index
    %70 = vector.load %arg7[%c0_70, %c1_71, %c0_72] : memref<1x2x8xf32, #tpu.memory_space<vmem>>, vector<1x1x8xf32>
    %71 = vector.shape_cast %70 : vector<1x1x8xf32> to vector<1x8xf32>
    %72 = vector.shape_cast %69 : vector<1x8xf32> to vector<1x1x8xf32>
    tpu.vector_store %arg7[%c0_70, %c1_71, %c0_72], %72 {strides = array<i32>} : memref<1x2x8xf32, #tpu.memory_space<vmem>>, vector<1x1x8xf32>,
    %73 = vector.shape_cast %61 : vector<64x8xf32> to vector<1x8x8x8xf32>
    %74 = arith.truncf %73 : vector<1x8x8x8xf32> to vector<1x8x8x8xbf16>
    %c0_73 = arith.constant 0 : index
    %c0_74 = arith.constant 0 : index
    %c0_75 = arith.constant 0 : index
    %c0_76 = arith.constant 0 : index
    %75 = vector.load %arg6[%c0_73, %c0_74, %c0_75, %c0_76] : memref<1x8x8x8xbf16, #tpu.memory_space<vmem>>, vector<1x8x8x8xbf16>
    tpu.vector_store %arg6[%c0_73, %c0_74, %c0_75, %c0_76], %74 {strides = array<i32>} : memref<1x8x8x8xbf16, #tpu.memory_space<vmem>>, vector<1x8x8x8xbf16>,
    return
  }
  func.func @transform_0(%arg0: i32) -> (i32, i32, i32, i32) {
    %c0_i32 = arith.constant 0 : i32
    %c0_i32_0 = arith.constant 0 : i32
    %c0_i32_1 = arith.constant 0 : i32
    %c0_i32_2 = arith.constant 0 : i32
    return %arg0, %c0_i32, %c0_i32_0, %c0_i32_1 : i32, i32, i32, i32
  }
  func.func @transform_1(%arg0: i32) -> (i32, i32) {
    %c0_i32 = arith.constant 0 : i32
    %c0_i32_0 = arith.constant 0 : i32
    %c0_i32_1 = arith.constant 0 : i32
    return %c0_i32, %c0_i32_0 : i32, i32
  }
  func.func @transform_2(%arg0: i32) -> (i32, i32) {
    %c0_i32 = arith.constant 0 : i32
    %c0_i32_0 = arith.constant 0 : i32
    %c0_i32_1 = arith.constant 0 : i32
    return %c0_i32, %c0_i32_0 : i32, i32
  }
  func.func @transform_3(%arg0: i32) -> (i32, i32) {
    %c0_i32 = arith.constant 0 : i32
    %c0_i32_0 = arith.constant 0 : i32
    %c0_i32_1 = arith.constant 0 : i32
    return %c0_i32, %c0_i32_0 : i32, i32
  }
  func.func @transform_4(%arg0: i32) -> (i32, i32) {
    %c0_i32 = arith.constant 0 : i32
    %c0_i32_0 = arith.constant 0 : i32
    %c0_i32_1 = arith.constant 0 : i32
    return %c0_i32, %c0_i32_0 : i32, i32
  }
  func.func @transform_5(%arg0: i32) -> (i32, i32, i32, i32) {
    %c0_i32 = arith.constant 0 : i32
    %c0_i32_0 = arith.constant 0 : i32
    %c0_i32_1 = arith.constant 0 : i32
    %c0_i32_2 = arith.constant 0 : i32
    return %arg0, %c0_i32, %c0_i32_0, %c0_i32_1 : i32, i32, i32, i32
  }
  func.func @transform_6(%arg0: i32) -> (i32, i32, i32) {
    %c0_i32 = arith.constant 0 : i32
    %c0_i32_0 = arith.constant 0 : i32
    %c0_i32_1 = arith.constant 0 : i32
    return %arg0, %c0_i32, %c0_i32_0 : i32, i32, i32
  }
}

</mosaic_0001>

<llo_original>
// kernel: down_block.5
$region0: #{down_block.5}
  #allocation0 [shape = 'u32[]', space=smem, size = 0x4, offset = 0x4, fixed_abs, tag = 'smem constant byte address 0x4 - core index']
  #allocation1 [shape = 'u32[72,128]{1,0:T(1,128)}', space=vmem, size = 0x9000, scoped, tag = 'internal scratch']
  %s0 = inlined_call_operand.vmem [shape: bf16[2,8,8,8], index: 0, kind: input, shape index: {}]
  %s1 = inlined_call_operand.vmem [shape: f32[1,8], index: 1, kind: input, shape index: {}]
  %s2 = inlined_call_operand.vmem [shape: f32[1,8], index: 2, kind: input, shape index: {}]
  %s3 = inlined_call_operand.vmem [shape: f32[2,8,8,8], index: 3, kind: output, shape index: {}]
  %s4 = sld [smem:[#allocation0]]
  $region45: #{down_block.5} parent=0
    _
  %s6 = ssub.s32 1, %s4
  %s7 = scalar_select 0, %s6, %s4
  loop: start=0, step=1, limit=4
  $region2: #{down_block.5} parent=0 // loop_pre_header
    _
  $region3: #{down_block.5} parent=0 // loop_header
    %s9 = sphi 0, %s13
    %p10 = scmp.ge.s32.totalorder %s9, 4
    %s19 = sphi 0, %s21
    %s22 = sphi 0, %s19
    %s23 = sphi 0, %s22
    %s39 = sphi 0, %s23
    %s43 = sphi 0, %s43
    %s45 = sphi 0, %s43
    %s46 = sphi 0, %s45
    %s60 = sphi 0, %s46
    %s64 = sphi 0, %s64
    %s66 = sphi 0, %s64
    %s67 = sphi 0, %s66
    %s81 = sphi 0, %s67
    %s87 = sphi 0, %s89
    %s90 = sphi 0, %s87
    %s91 = sphi 0, %s90
    %s107 = sphi 0, %s91
  $region4: #{down_block.5} parent=0 // loop_header_branch
    %12 = sbr.rel (%p10) target = $region8
  $region5: #{down_block.5} parent=0 // loop_body
    %s14 = ssub.s32 %s9, 1
    %s15 = ssub.s32 %s9, 2
    %s16 = sadd.s32 %s9, 1
    %s17 = ssub.s32 %s9, %s16
    %p18 = scmp.eq.s32.totalorder %s17, 0
    %s20 = sadd.s32 %s19, 1
    %s21 = scalar_select %p18, %s19, %s20
    %p24 = pneg %p18
    %p25 = scmp.eq.s32.totalorder %s9, 1
    %p26 = por %p24, %p25
    %p27 = scmp.ne.s32.totalorder %s19, %s22
    %p28 = scmp.eq.s32.totalorder %s9, 0
    %p29 = por %p27, %p28
    %p30 = scmp.ne.s32.totalorder %s19, %s22
    %p31 = scmp.eq.s32.totalorder %s14, 1
    %p32 = por %p30, %p31
    %p33 = scmp.ne.s32.totalorder %s22, %s23
    %p34 = scmp.eq.s32.totalorder %s14, 0
    %p35 = por %p33, %p34
    %p36 = scmp.ne.s32.totalorder %s22, %s23
    %p37 = scmp.eq.s32.totalorder %s15, 1
    %p38 = por %p36, %p37
    %p40 = scmp.ne.s32.totalorder %s23, %s39
    %p41 = scmp.eq.s32.totalorder %s15, 0
    %p42 = por %p40, %p41
    %s44 = sadd.s32 %s43, 1
    %p47 = scmp.eq.s32.totalorder %s9, 1
    %p48 = scmp.ne.s32.totalorder %s43, %s45
    %p49 = scmp.eq.s32.totalorder %s9, 0
    %p50 = por %p48, %p49
    %p51 = scmp.ne.s32.totalorder %s43, %s45
    %p52 = scmp.eq.s32.totalorder %s14, 1
    %p53 = por %p51, %p52
    %p54 = scmp.ne.s32.totalorder %s45, %s46
    %p55 = scmp.eq.s32.totalorder %s14, 0
    %p56 = por %p54, %p55
    %p57 = scmp.ne.s32.totalorder %s45, %s46
    %p58 = scmp.eq.s32.totalorder %s15, 1
    %p59 = por %p57, %p58
    %p61 = scmp.ne.s32.totalorder %s46, %s60
    %p62 = scmp.eq.s32.totalorder %s15, 0
    %p63 = por %p61, %p62
    %s65 = sadd.s32 %s64, 1
    %p68 = scmp.eq.s32.totalorder %s9, 1
    %p69 = scmp.ne.s32.totalorder %s64, %s66
    %p70 = scmp.eq.s32.totalorder %s9, 0
    %p71 = por %p69, %p70
    %p72 = scmp.ne.s32.totalorder %s64, %s66
    %p73 = scmp.eq.s32.totalorder %s14, 1
    %p74 = por %p72, %p73
    %p75 = scmp.ne.s32.totalorder %s66, %s67
    %p76 = scmp.eq.s32.totalorder %s14, 0
    %p77 = por %p75, %p76
    %p78 = scmp.ne.s32.totalorder %s66, %s67
    %p79 = scmp.eq.s32.totalorder %s15, 1
    %p80 = por %p78, %p79
    %p82 = scmp.ne.s32.totalorder %s67, %s81
    %p83 = scmp.eq.s32.totalorder %s15, 0
    %p84 = por %p82, %p83
    %s85 = ssub.s32 %s9, %s16
    %p86 = scmp.eq.s32.totalorder %s85, 0
    %s88 = sadd.s32 %s87, 1
    %s89 = scalar_select %p86, %s87, %s88
    %p92 = pneg %p86
    %p93 = scmp.eq.s32.totalorder %s9, 1
    %p94 = por %p92, %p93
    %p95 = scmp.ne.s32.totalorder %s87, %s90
    %p96 = scmp.eq.s32.totalorder %s9, 0
    %p97 = por %p95, %p96
    %p98 = scmp.ne.s32.totalorder %s87, %s90
    %p99 = scmp.eq.s32.totalorder %s14, 1
    %p100 = por %p98, %p99
    %p101 = scmp.ne.s32.totalorder %s90, %s91
    %p102 = scmp.eq.s32.totalorder %s14, 0
    %p103 = por %p101, %p102
    %p104 = scmp.ne.s32.totalorder %s90, %s91
    %p105 = scmp.eq.s32.totalorder %s15, 1
    %p106 = por %p104, %p105
    %p108 = scmp.ne.s32.totalorder %s91, %s107
    %p109 = scmp.eq.s32.totalorder %s15, 0
    %p110 = por %p108, %p109
    %p111 = scmp.le.s32.totalorder 1, %s9
    %p112 = scmp.lt.s32.totalorder %s9, 3
    %p113 = pnand %p111, %p112
    %p114 = pneg %p113
    // Predicated region
    $region9: #{down_block.5} parent=5 // pred_check
      _
    $region10: #{down_block.5} parent=5 // pred_check_branch
      %116 = sbr.rel (%p113) target = $region12
    $region11: #{down_block.5} parent=5 // pred_region
      %s117 = ssub.s32 %s9, 1
      // Predicated region
      $region13: #{down_block.5} parent=11 // pred_check
        %p118 = pneg %p56
      $region14: #{down_block.5} parent=11 // pred_check_branch
        %120 = sbr.rel (%p118) target = $region16
      $region15: #{down_block.5} parent=11 // pred_region
        _
      $region16: #{down_block.5} parent=11 // pred_fallthru
        _
      // Predicated region
      $region17: #{down_block.5} parent=11 // pred_check
        %p121 = pneg %p77
      $region18: #{down_block.5} parent=11 // pred_check_branch
        %123 = sbr.rel (%p121) target = $region20
      $region19: #{down_block.5} parent=11 // pred_region
        _
      $region20: #{down_block.5} parent=11 // pred_fallthru
        _
    $region12: #{down_block.5} parent=5 // pred_fallthru
      _
    %p124 = scmp.lt.s32.totalorder %s9, 2
    // Predicated region
    $region21: #{down_block.5} parent=5 // pred_check
      %p125 = pneg %p124
    $region22: #{down_block.5} parent=5 // pred_check_branch
      %127 = sbr.rel (%p125) target = $region24
    $region23: #{down_block.5} parent=5 // pred_region
      // Predicated region
      $region25: #{down_block.5} parent=23 // pred_check
        %p128 = pneg %p29
      $region26: #{down_block.5} parent=23 // pred_check_branch
        %130 = sbr.rel (%p128) target = $region28
      $region27: #{down_block.5} parent=23 // pred_region
        %p131 = scmp.lt.s32.totalorder %s9, 1
        %s132 = scalar_select %p131, %s9, 1
        %s133 = smul.addr %s132, 8
        %s134 = smul.addr %s133, 4
        %s135 = scalar_lea.vmem %s0, %s134
      $region28: #{down_block.5} parent=23 // pred_fallthru
        _
    $region24: #{down_block.5} parent=5 // pred_fallthru
      _
    %p136 = scmp.le.s32.totalorder 1, %s9
    %p137 = scmp.lt.s32.totalorder %s9, 3
    %p138 = pnand %p136, %p137
    %p139 = pneg %p138
    // Predicated region
    $region29: #{down_block.5} parent=5 // pred_check
      _
    $region30: #{down_block.5} parent=5 // pred_check_branch
      %141 = sbr.rel (%p138) target = $region32
    $region31: #{down_block.5} parent=5 // pred_region
      %s142 = ssub.s32 %s9, 1
      %p143 = scmp.lt.s32.totalorder %s14, 1
      %s144 = scalar_select %p143, %s14, 1
      %s145 = smul.addr %s144, 8
      %s146 = smul.addr %s145, 4
      %s147 = scalar_lea.vmem %s0, %s146
      %p148 = pneg %p35
      %p149 = pneg %p32
      %p150 = pneg %p56
      %p151 = pneg %p53
      %p152 = pneg %p77
      %p153 = pneg %p74
      %p154 = pneg %p103
      %p155 = pneg %p100
      %p156 = scmp.lt.s32.totalorder %s14, 1
      %s157 = scalar_select %p156, %s14, 1
      %s158 = smul.addr %s157, 8
      %s159 = smul.addr %s158, 8
      %s160 = scalar_lea.vmem %s3, %s159
      %p161 = scmp.lt.s32.totalorder %s14, 1
      %s162 = scalar_select %p161, %s14, 1
      %s163 = smul.addr %s162, 8
      %s164 = smul.addr %s163, 4
      %s165 = scalar_lea.vmem %s0, %s164
      %p166 = scmp.lt.s32.totalorder %s14, 1
      %s167 = scalar_select %p166, %s14, 1
      %s168 = smul.addr %s167, 8
      %s169 = smul.addr %s168, 8
      %s170 = scalar_lea.vmem %s3, %s169
      %v171 = vld [vmem:[%s165] sm:$0xf]
      %v172 = vld [vmem:[%s165 + $0x4] sm:$0xf]
      %v173 = vld [vmem:[%s165 + $0x8] sm:$0xf]
      %v174 = vld [vmem:[%s165 + $0xc] sm:$0xf]
      %v175 = vld [vmem:[%s165 + $0x10] sm:$0xf]
      %v176 = vld [vmem:[%s165 + $0x14] sm:$0xf]
      %v177 = vld [vmem:[%s165 + $0x18] sm:$0xf]
      %v178 = vld [vmem:[%s165 + $0x1c] sm:$0xf]
      %v179 = vunpack.c.l.bf16 %v171
      %v180 = vunpack.c.l.bf16 %v172
      %v181 = vunpack.c.l.bf16 %v173
      %v182 = vunpack.c.l.bf16 %v174
      %v183 = vunpack.c.l.bf16 %v175
      %v184 = vunpack.c.l.bf16 %v176
      %v185 = vunpack.c.l.bf16 %v177
      %v186 = vunpack.c.l.bf16 %v178
      %v187 = vld [vmem:[%s1] sm:$0x1]
      %v189 = vperm.slane %v187, 0
      %v191 = vmul.f32 %v179, %v189
      %v192 = vmul.f32 %v180, %v189
      %v193 = vmul.f32 %v181, %v189
      %v194 = vmul.f32 %v182, %v189
      %v195 = vmul.f32 %v183, %v189
      %v196 = vmul.f32 %v184, %v189
      %v197 = vmul.f32 %v185, %v189
      %v198 = vmul.f32 %v186, %v189
      %v199 = vld [vmem:[%s2] sm:$0x1]
      %v201 = vperm.slane %v199, 0
      %v203 = vadd.f32 %v191, %v201
      %v204 = vadd.f32 %v192, %v201
      %v205 = vadd.f32 %v193, %v201
      %v206 = vadd.f32 %v194, %v201
      %v207 = vadd.f32 %v195, %v201
      %v208 = vadd.f32 %v196, %v201
      %v209 = vadd.f32 %v197, %v201
      %v210 = vadd.f32 %v198, %v201
      %v211 = vmax.f32 %v203, 0.0
      %v212 = vmax.f32 %v204, 0.0
      %v213 = vmax.f32 %v205, 0.0
      %v214 = vmax.f32 %v206, 0.0
      %v215 = vmax.f32 %v207, 0.0
      %v216 = vmax.f32 %v208, 0.0
      %v217 = vmax.f32 %v209, 0.0
      %v218 = vmax.f32 %v210, 0.0
      %vm219 = vcmask 64512
      %220 = vst.msk [vmem:[%s170] sm:$0xff] %vm219, %v211
      %221 = vst.msk [vmem:[%s170 + $0x8] sm:$0xff] %vm219, %v212
      %222 = vst.msk [vmem:[%s170 + $0x10] sm:$0xff] %vm219, %v213
      %223 = vst.msk [vmem:[%s170 + $0x18] sm:$0xff] %vm219, %v214
      %224 = vst.msk [vmem:[%s170 + $0x20] sm:$0xff] %vm219, %v215
      %225 = vst.msk [vmem:[%s170 + $0x28] sm:$0xff] %vm219, %v216
      %226 = vst.msk [vmem:[%s170 + $0x30] sm:$0xff] %vm219, %v217
      %227 = vst.msk [vmem:[%s170 + $0x38] sm:$0xff] %vm219, %v218
      %p228 = scmp.lt.s32.totalorder %s14, 1
      %s229 = scalar_select %p228, %s14, 1
      %s230 = smul.addr %s229, 8
      %s231 = smul.addr %s230, 8
      %s232 = scalar_lea.vmem %s3, %s231
      // Predicated region
      $region33: #{down_block.5} parent=31 // pred_check
        %p233 = pneg %p100
      $region34: #{down_block.5} parent=31 // pred_check_branch
        %235 = sbr.rel (%p233) target = $region36
      $region35: #{down_block.5} parent=31 // pred_region
        _
      $region36: #{down_block.5} parent=31 // pred_fallthru
        _
    $region32: #{down_block.5} parent=5 // pred_fallthru
      _
    %p236 = scmp.le.s32.totalorder 2, %s9
    // Predicated region
    $region37: #{down_block.5} parent=5 // pred_check
      %p237 = pneg %p236
    $region38: #{down_block.5} parent=5 // pred_check_branch
      %239 = sbr.rel (%p237) target = $region40
    $region39: #{down_block.5} parent=5 // pred_region
      %s240 = ssub.s32 %s9, 2
      // Predicated region
      $region41: #{down_block.5} parent=39 // pred_check
        %p241 = pneg %p106
      $region42: #{down_block.5} parent=39 // pred_check_branch
        %243 = sbr.rel (%p241) target = $region44
      $region43: #{down_block.5} parent=39 // pred_region
        %p244 = scmp.lt.s32.totalorder %s15, 1
        %s245 = scalar_select %p244, %s15, 1
        %s246 = smul.addr %s245, 8
        %s247 = smul.addr %s246, 8
        %s248 = scalar_lea.vmem %s3, %s247
      $region44: #{down_block.5} parent=39 // pred_fallthru
        _
    $region40: #{down_block.5} parent=5 // pred_fallthru
      _
  $region6: #{down_block.5} parent=0 // loop_footer
    %s13 = sadd.s32 1, %s9
  $region7: #{down_block.5} parent=0 // loop_footer_branch
    %8 = sbr.rel target = $region3
  $region8: #{down_block.5} parent=0 // loop_exit
    _

// kernel: down_block.3
$region0: #{down_block.3}
  #allocation0 [shape = 'u32[]', space=smem, size = 0x4, offset = 0x4, fixed_abs, tag = 'smem constant byte address 0x4 - core index']
  #allocation1 [shape = 'u32[72,128]{1,0:T(1,128)}', space=vmem, size = 0x9000, scoped, tag = 'internal scratch']
  #allocation2 [shape = 'f32[10,16,4]{2,1,0:T(8,128)}', space=vmem, size = 0x14000, scoped, tag = 'scratch operand']
  #allocation3 [shape = 'bf16[64,36]{1,0:T(8,128)(2,1)}', space=vmem, size = 0x4000, scoped, tag = 'scratch operand']
  %s0 = inlined_call_operand.vmem [shape: f32[2,16,16,4], index: 0, kind: input, shape index: {}]
  %s1 = inlined_call_operand.vmem [shape: bf16[36,8], index: 1, kind: input, shape index: {}]
  %s2 = inlined_call_operand.vmem [shape: f32[1,8], index: 2, kind: input, shape index: {}]
  %s3 = inlined_call_operand.vmem [shape: f32[1,4], index: 3, kind: input, shape index: {}]
  %s4 = inlined_call_operand.vmem [shape: f32[1,4], index: 4, kind: input, shape index: {}]
  %s5 = inlined_call_operand.vmem [shape: bf16[2,8,8,8], index: 5, kind: output, shape index: {0}]
  %s6 = inlined_call_operand.vmem [shape: f32[2,2,8], index: 6, kind: output, shape index: {1}]
  %7 = xla_tuple %s5, %s6
  %s8 = sld [smem:[#allocation0]]
  $region61: #{down_block.3} parent=0
    _
  %s10 = ssub.s32 1, %s8
  %s11 = scalar_select 0, %s10, %s8
  loop: start=0, step=1, limit=4
  $region2: #{down_block.3} parent=0 // loop_pre_header
    _
  $region3: #{down_block.3} parent=0 // loop_header
    %s13 = sphi 0, %s17
    %p14 = scmp.ge.s32.totalorder %s13, 4
    %s23 = sphi 0, %s25
    %s26 = sphi 0, %s23
    %s27 = sphi 0, %s26
    %s43 = sphi 0, %s27
    %s47 = sphi 0, %s47
    %s49 = sphi 0, %s47
    %s50 = sphi 0, %s49
    %s64 = sphi 0, %s50
    %s68 = sphi 0, %s68
    %s70 = sphi 0, %s68
    %s71 = sphi 0, %s70
    %s85 = sphi 0, %s71
    %s89 = sphi 0, %s89
    %s91 = sphi 0, %s89
    %s92 = sphi 0, %s91
    %s106 = sphi 0, %s92
    %s110 = sphi 0, %s110
    %s112 = sphi 0, %s110
    %s113 = sphi 0, %s112
    %s127 = sphi 0, %s113
    %s133 = sphi 0, %s135
    %s136 = sphi 0, %s133
    %s137 = sphi 0, %s136
    %s153 = sphi 0, %s137
    %s159 = sphi 0, %s161
    %s162 = sphi 0, %s159
    %s163 = sphi 0, %s162
    %s179 = sphi 0, %s163
  $region4: #{down_block.3} parent=0 // loop_header_branch
    %16 = sbr.rel (%p14) target = $region8
  $region5: #{down_block.3} parent=0 // loop_body
    %s18 = ssub.s32 %s13, 1
    %s19 = ssub.s32 %s13, 2
    %s20 = sadd.s32 %s13, 1
    %s21 = ssub.s32 %s13, %s20
    %p22 = scmp.eq.s32.totalorder %s21, 0
    %s24 = sadd.s32 %s23, 1
    %s25 = scalar_select %p22, %s23, %s24
    %p28 = pneg %p22
    %p29 = scmp.eq.s32.totalorder %s13, 1
    %p30 = por %p28, %p29
    %p31 = scmp.ne.s32.totalorder %s23, %s26
    %p32 = scmp.eq.s32.totalorder %s13, 0
    %p33 = por %p31, %p32
    %p34 = scmp.ne.s32.totalorder %s23, %s26
    %p35 = scmp.eq.s32.totalorder %s18, 1
    %p36 = por %p34, %p35
    %p37 = scmp.ne.s32.totalorder %s26, %s27
    %p38 = scmp.eq.s32.totalorder %s18, 0
    %p39 = por %p37, %p38
    %p40 = scmp.ne.s32.totalorder %s26, %s27
    %p41 = scmp.eq.s32.totalorder %s19, 1
    %p42 = por %p40, %p41
    %p44 = scmp.ne.s32.totalorder %s27, %s43
    %p45 = scmp.eq.s32.totalorder %s19, 0
    %p46 = por %p44, %p45
    %s48 = sadd.s32 %s47, 1
    %p51 = scmp.eq.s32.totalorder %s13, 1
    %p52 = scmp.ne.s32.totalorder %s47, %s49
    %p53 = scmp.eq.s32.totalorder %s13, 0
    %p54 = por %p52, %p53
    %p55 = scmp.ne.s32.totalorder %s47, %s49
    %p56 = scmp.eq.s32.totalorder %s18, 1
    %p57 = por %p55, %p56
    %p58 = scmp.ne.s32.totalorder %s49, %s50
    %p59 = scmp.eq.s32.totalorder %s18, 0
    %p60 = por %p58, %p59
    %p61 = scmp.ne.s32.totalorder %s49, %s50
    %p62 = scmp.eq.s32.totalorder %s19, 1
    %p63 = por %p61, %p62
    %p65 = scmp.ne.s32.totalorder %s50, %s64
    %p66 = scmp.eq.s32.totalorder %s19, 0
    %p67 = por %p65, %p66
    %s69 = sadd.s32 %s68, 1
    %p72 = scmp.eq.s32.totalorder %s13, 1
    %p73 = scmp.ne.s32.totalorder %s68, %s70
    %p74 = scmp.eq.s32.totalorder %s13, 0
    %p75 = por %p73, %p74
    %p76 = scmp.ne.s32.totalorder %s68, %s70
    %p77 = scmp.eq.s32.totalorder %s18, 1
    %p78 = por %p76, %p77
    %p79 = scmp.ne.s32.totalorder %s70, %s71
    %p80 = scmp.eq.s32.totalorder %s18, 0
    %p81 = por %p79, %p80
    %p82 = scmp.ne.s32.totalorder %s70, %s71
    %p83 = scmp.eq.s32.totalorder %s19, 1
    %p84 = por %p82, %p83
    %p86 = scmp.ne.s32.totalorder %s71, %s85
    %p87 = scmp.eq.s32.totalorder %s19, 0
    %p88 = por %p86, %p87
    %s90 = sadd.s32 %s89, 1
    %p93 = scmp.eq.s32.totalorder %s13, 1
    %p94 = scmp.ne.s32.totalorder %s89, %s91
    %p95 = scmp.eq.s32.totalorder %s13, 0
    %p96 = por %p94, %p95
    %p97 = scmp.ne.s32.totalorder %s89, %s91
    %p98 = scmp.eq.s32.totalorder %s18, 1
    %p99 = por %p97, %p98
    %p100 = scmp.ne.s32.totalorder %s91, %s92
    %p101 = scmp.eq.s32.totalorder %s18, 0
    %p102 = por %p100, %p101
    %p103 = scmp.ne.s32.totalorder %s91, %s92
    %p104 = scmp.eq.s32.totalorder %s19, 1
    %p105 = por %p103, %p104
    %p107 = scmp.ne.s32.totalorder %s92, %s106
    %p108 = scmp.eq.s32.totalorder %s19, 0
    %p109 = por %p107, %p108
    %s111 = sadd.s32 %s110, 1
    %p114 = scmp.eq.s32.totalorder %s13, 1
    %p115 = scmp.ne.s32.totalorder %s110, %s112
    %p116 = scmp.eq.s32.totalorder %s13, 0
    %p117 = por %p115, %p116
    %p118 = scmp.ne.s32.totalorder %s110, %s112
    %p119 = scmp.eq.s32.totalorder %s18, 1
    %p120 = por %p118, %p119
    %p121 = scmp.ne.s32.totalorder %s112, %s113
    %p122 = scmp.eq.s32.totalorder %s18, 0
    %p123 = por %p121, %p122
    %p124 = scmp.ne.s32.totalorder %s112, %s113
    %p125 = scmp.eq.s32.totalorder %s19, 1
    %p126 = por %p124, %p125
    %p128 = scmp.ne.s32.totalorder %s113, %s127
    %p129 = scmp.eq.s32.totalorder %s19, 0
    %p130 = por %p128, %p129
    %s131 = ssub.s32 %s13, %s20
    %p132 = scmp.eq.s32.totalorder %s131, 0
    %s134 = sadd.s32 %s133, 1
    %s135 = scalar_select %p132, %s133, %s134
    %p138 = pneg %p132
    %p139 = scmp.eq.s32.totalorder %s13, 1
    %p140 = por %p138, %p139
    %p141 = scmp.ne.s32.totalorder %s133, %s136
    %p142 = scmp.eq.s32.totalorder %s13, 0
    %p143 = por %p141, %p142
    %p144 = scmp.ne.s32.totalorder %s133, %s136
    %p145 = scmp.eq.s32.totalorder %s18, 1
    %p146 = por %p144, %p145
    %p147 = scmp.ne.s32.totalorder %s136, %s137
    %p148 = scmp.eq.s32.totalorder %s18, 0
    %p149 = por %p147, %p148
    %p150 = scmp.ne.s32.totalorder %s136, %s137
    %p151 = scmp.eq.s32.totalorder %s19, 1
    %p152 = por %p150, %p151
    %p154 = scmp.ne.s32.totalorder %s137, %s153
    %p155 = scmp.eq.s32.totalorder %s19, 0
    %p156 = por %p154, %p155
    %s157 = ssub.s32 %s13, %s20
    %p158 = scmp.eq.s32.totalorder %s157, 0
    %s160 = sadd.s32 %s159, 1
    %s161 = scalar_select %p158, %s159, %s160
    %p164 = pneg %p158
    %p165 = scmp.eq.s32.totalorder %s13, 1
    %p166 = por %p164, %p165
    %p167 = scmp.ne.s32.totalorder %s159, %s162
    %p168 = scmp.eq.s32.totalorder %s13, 0
    %p169 = por %p167, %p168
    %p170 = scmp.ne.s32.totalorder %s159, %s162
    %p171 = scmp.eq.s32.totalorder %s18, 1
    %p172 = por %p170, %p171
    %p173 = scmp.ne.s32.totalorder %s162, %s163
    %p174 = scmp.eq.s32.totalorder %s18, 0
    %p175 = por %p173, %p174
    %p176 = scmp.ne.s32.totalorder %s162, %s163
    %p177 = scmp.eq.s32.totalorder %s19, 1
    %p178 = por %p176, %p177
    %p180 = scmp.ne.s32.totalorder %s163, %s179
    %p181 = scmp.eq.s32.totalorder %s19, 0
    %p182 = por %p180, %p181
    %p183 = scmp.le.s32.totalorder 1, %s13
    %p184 = scmp.lt.s32.totalorder %s13, 3
    %p185 = pnand %p183, %p184
    %p186 = pneg %p185
    // Predicated region
    $region9: #{down_block.3} parent=5 // pred_check
      _
    $region10: #{down_block.3} parent=5 // pred_check_branch
      %188 = sbr.rel (%p185) target = $region12
    $region11: #{down_block.3} parent=5 // pred_region
      %s189 = ssub.s32 %s13, 1
      // Predicated region
      $region13: #{down_block.3} parent=11 // pred_check
        %p190 = pneg %p60
      $region14: #{down_block.3} parent=11 // pred_check_branch
        %192 = sbr.rel (%p190) target = $region16
      $region15: #{down_block.3} parent=11 // pred_region
        _
      $region16: #{down_block.3} parent=11 // pred_fallthru
        _
      // Predicated region
      $region17: #{down_block.3} parent=11 // pred_check
        %p193 = pneg %p81
      $region18: #{down_block.3} parent=11 // pred_check_branch
        %195 = sbr.rel (%p193) target = $region20
      $region19: #{down_block.3} parent=11 // pred_region
        _
      $region20: #{down_block.3} parent=11 // pred_fallthru
        _
      // Predicated region
      $region21: #{down_block.3} parent=11 // pred_check
        %p196 = pneg %p102
      $region22: #{down_block.3} parent=11 // pred_check_branch
        %198 = sbr.rel (%p196) target = $region24
      $region23: #{down_block.3} parent=11 // pred_region
        _
      $region24: #{down_block.3} parent=11 // pred_fallthru
        _
      // Predicated region
      $region25: #{down_block.3} parent=11 // pred_check
        %p199 = pneg %p123
      $region26: #{down_block.3} parent=11 // pred_check_branch
        %201 = sbr.rel (%p199) target = $region28
      $region27: #{down_block.3} parent=11 // pred_region
        _
      $region28: #{down_block.3} parent=11 // pred_fallthru
        _
    $region12: #{down_block.3} parent=5 // pred_fallthru
      _
    %p202 = scmp.lt.s32.totalorder %s13, 2
    // Predicated region
    $region29: #{down_block.3} parent=5 // pred_check
      %p203 = pneg %p202
    $region30: #{down_block.3} parent=5 // pred_check_branch
      %205 = sbr.rel (%p203) target = $region32
    $region31: #{down_block.3} parent=5 // pred_region
      // Predicated region
      $region33: #{down_block.3} parent=31 // pred_check
        %p206 = pneg %p33
      $region34: #{down_block.3} parent=31 // pred_check_branch
        %208 = sbr.rel (%p206) target = $region36
      $region35: #{down_block.3} parent=31 // pred_region
        %p209 = scmp.lt.s32.totalorder %s13, 1
        %s210 = scalar_select %p209, %s13, 1
        %s211 = smul.addr %s210, 32
        %s212 = smul.addr %s211, 8
        %s213 = scalar_lea.vmem %s0, %s212
      $region36: #{down_block.3} parent=31 // pred_fallthru
        _
    $region32: #{down_block.3} parent=5 // pred_fallthru
      _
    %p214 = scmp.le.s32.totalorder 1, %s13
    %p215 = scmp.lt.s32.totalorder %s13, 3
    %p216 = pnand %p214, %p215
    %p217 = pneg %p216
    // Predicated region
    $region37: #{down_block.3} parent=5 // pred_check
      _
    $region38: #{down_block.3} parent=5 // pred_check_branch
      %219 = sbr.rel (%p216) target = $region40
    $region39: #{down_block.3} parent=5 // pred_region
      %s220 = ssub.s32 %s13, 1
      %p221 = scmp.lt.s32.totalorder %s18, 1
      %s222 = scalar_select %p221, %s18, 1
      %s223 = smul.addr %s222, 32
      %s224 = smul.addr %s223, 8
      %s225 = scalar_lea.vmem %s0, %s224
      %p226 = pneg %p39
      %p227 = pneg %p36
      %p228 = pneg %p60
      %p229 = pneg %p57
      %p230 = pneg %p81
      %p231 = pneg %p78
      %p232 = pneg %p102
      %p233 = pneg %p99
      %p234 = pneg %p123
      %p235 = pneg %p120
      %p236 = pneg %p149
      %p237 = pneg %p146
      %p238 = scmp.lt.s32.totalorder %s18, 1
      %s239 = scalar_select %p238, %s18, 1
      %s240 = smul.addr %s239, 8
      %s241 = smul.addr %s240, 4
      %s242 = scalar_lea.vmem %s5, %s241
      %p243 = pneg %p175
      %p244 = pneg %p172
      %p245 = scmp.lt.s32.totalorder %s18, 1
      %s246 = scalar_select %p245, %s18, 1
      %s247 = smul.addr %s246, 2
      %s248 = scalar_lea.vmem %s6, %s247
      %p249 = scmp.lt.s32.totalorder %s18, 1
      %s250 = scalar_select %p249, %s18, 1
      %s251 = smul.addr %s250, 32
      %s252 = smul.addr %s251, 8
      %s253 = scalar_lea.vmem %s0, %s252
      %p254 = scmp.lt.s32.totalorder %s18, 1
      %s255 = scalar_select %p254, %s18, 1
      %s256 = smul.addr %s255, 8
      %s257 = smul.addr %s256, 4
      %s258 = scalar_lea.vmem %s5, %s257
      %p259 = scmp.lt.s32.totalorder %s18, 1
      %s260 = scalar_select %p259, %s18, 1
      %s261 = smul.addr %s260, 2
      %s262 = scalar_lea.vmem %s6, %s261
      %v264 = vld [vmem:[%s253] ss:$2 sm:$0xff]
      %s265 = scalar_lea.vmem %s253, 16
      %v266 = vld [vmem:[%s265] ss:$2 sm:$0xff]
      %s267 = scalar_lea.vmem %s253, 32
      %v268 = vld [vmem:[%s267] ss:$2 sm:$0xff]
      %s269 = scalar_lea.vmem %s253, 48
      %v270 = vld [vmem:[%s269] ss:$2 sm:$0xff]
      %s271 = scalar_lea.vmem %s253, 64
      %v272 = vld [vmem:[%s271] ss:$2 sm:$0xff]
      %s273 = scalar_lea.vmem %s253, 80
      %v274 = vld [vmem:[%s273] ss:$2 sm:$0xff]
      %s275 = scalar_lea.vmem %s253, 96
      %v276 = vld [vmem:[%s275] ss:$2 sm:$0xff]
      %s277 = scalar_lea.vmem %s253, 112
      %v278 = vld [vmem:[%s277] ss:$2 sm:$0xff]
      %s279 = scalar_lea.vmem %s253, 128
      %v280 = vld [vmem:[%s279] ss:$2 sm:$0xff]
      %s281 = scalar_lea.vmem %s253, 144
      %v282 = vld [vmem:[%s281] ss:$2 sm:$0xff]
      %s283 = scalar_lea.vmem %s253, 160
      %v284 = vld [vmem:[%s283] ss:$2 sm:$0xff]
      %s285 = scalar_lea.vmem %s253, 176
      %v286 = vld [vmem:[%s285] ss:$2 sm:$0xff]
      %s287 = scalar_lea.vmem %s253, 192
      %v288 = vld [vmem:[%s287] ss:$2 sm:$0xff]
      %s289 = scalar_lea.vmem %s253, 208
      %v290 = vld [vmem:[%s289] ss:$2 sm:$0xff]
      %s291 = scalar_lea.vmem %s253, 224
      %v292 = vld [vmem:[%s291] ss:$2 sm:$0xff]
      %s293 = scalar_lea.vmem %s253, 240
      %v294 = vld [vmem:[%s293] ss:$2 sm:$0xff]
      %s295 = scalar_lea.vmem %s253, 1
      %v296 = vld [vmem:[%s295] ss:$2 sm:$0xff]
      %s297 = scalar_lea.vmem %s253, 17
      %v298 = vld [vmem:[%s297] ss:$2 sm:$0xff]
      %s299 = scalar_lea.vmem %s253, 33
      %v300 = vld [vmem:[%s299] ss:$2 sm:$0xff]
      %s301 = scalar_lea.vmem %s253, 49
      %v302 = vld [vmem:[%s301] ss:$2 sm:$0xff]
      %s303 = scalar_lea.vmem %s253, 65
      %v304 = vld [vmem:[%s303] ss:$2 sm:$0xff]
      %s305 = scalar_lea.vmem %s253, 81
      %v306 = vld [vmem:[%s305] ss:$2 sm:$0xff]
      %s307 = scalar_lea.vmem %s253, 97
      %v308 = vld [vmem:[%s307] ss:$2 sm:$0xff]
      %s309 = scalar_lea.vmem %s253, 113
      %v310 = vld [vmem:[%s309] ss:$2 sm:$0xff]
      %s311 = scalar_lea.vmem %s253, 129
      %v312 = vld [vmem:[%s311] ss:$2 sm:$0xff]
      %s313 = scalar_lea.vmem %s253, 145
      %v314 = vld [vmem:[%s313] ss:$2 sm:$0xff]
      %s315 = scalar_lea.vmem %s253, 161
      %v316 = vld [vmem:[%s315] ss:$2 sm:$0xff]
      %s317 = scalar_lea.vmem %s253, 177
      %v318 = vld [vmem:[%s317] ss:$2 sm:$0xff]
      %s319 = scalar_lea.vmem %s253, 193
      %v320 = vld [vmem:[%s319] ss:$2 sm:$0xff]
      %s321 = scalar_lea.vmem %s253, 209
      %v322 = vld [vmem:[%s321] ss:$2 sm:$0xff]
      %s323 = scalar_lea.vmem %s253, 225
      %v324 = vld [vmem:[%s323] ss:$2 sm:$0xff]
      %s325 = scalar_lea.vmem %s253, 241
      %v326 = vld [vmem:[%s325] ss:$2 sm:$0xff]
      %v327 = vmax.f32 %v264, %v296
      %v328 = vmax.f32 %v266, %v298
      %v329 = vmax.f32 %v268, %v300
      %v330 = vmax.f32 %v270, %v302
      %v331 = vmax.f32 %v272, %v304
      %v332 = vmax.f32 %v274, %v306
      %v333 = vmax.f32 %v276, %v308
      %v334 = vmax.f32 %v278, %v310
      %v335 = vmax.f32 %v280, %v312
      %v336 = vmax.f32 %v282, %v314
      %v337 = vmax.f32 %v284, %v316
      %v338 = vmax.f32 %v286, %v318
      %v339 = vmax.f32 %v288, %v320
      %v340 = vmax.f32 %v290, %v322
      %v341 = vmax.f32 %v292, %v324
      %v342 = vmax.f32 %v294, %v326
      %v343 = vmax.f32 %v327, %v328
      %v344 = vmax.f32 %v329, %v330
      %v345 = vmax.f32 %v331, %v332
      %v346 = vmax.f32 %v333, %v334
      %v347 = vmax.f32 %v335, %v336
      %v348 = vmax.f32 %v337, %v338
      %v349 = vmax.f32 %v339, %v340
      %v350 = vmax.f32 %v341, %v342
      %vm351 = vcmask 31744
      %352 = vst.msk [vmem:[#allocation2] sm:$0xff] %vm351, 0.0
      %vm353 = vcmask 25600
      %354 = vst.msk [vmem:[#allocation2 + $0x8] sm:$0x3] %vm353, 0.0
      %s355 = scalar_lea.vmem [#allocation2], 144
      %356 = vst.msk [vmem:[%s355] sm:$0xff] %vm351, 0.0
      %357 = vst.msk [vmem:[%s355 + $0x8] sm:$0x3] %vm353, 0.0
      %vm358 = vcmask 24576
      %359 = vst.msk [vmem:[#allocation2] sm:$0x1] %vm358, 0.0
      %360 = vst.msk [vmem:[#allocation2 + $0x10] sm:$0x1] %vm358, 0.0
      %361 = vst.msk [vmem:[#allocation2 + $0x20] sm:$0x1] %vm358, 0.0
      %362 = vst.msk [vmem:[#allocation2 + $0x30] sm:$0x1] %vm358, 0.0
      %363 = vst.msk [vmem:[#allocation2 + $0x40] sm:$0x1] %vm358, 0.0
      %364 = vst.msk [vmem:[#allocation2 + $0x50] sm:$0x1] %vm358, 0.0
      %365 = vst.msk [vmem:[#allocation2 + $0x60] sm:$0x1] %vm358, 0.0
      %366 = vst.msk [vmem:[#allocation2 + $0x70] sm:$0x1] %vm358, 0.0
      %367 = vst.msk [vmem:[#allocation2 + $0x80] sm:$0x1] %vm358, 0.0
      %368 = vst.msk [vmem:[#allocation2 + $0x90] sm:$0x1] %vm358, 0.0
      %369 = vst.msk [vmem:[#allocation2 + $0x9] sm:$0x1] %vm358, 0.0
      %370 = vst.msk [vmem:[#allocation2 + $0x19] sm:$0x1] %vm358, 0.0
      %371 = vst.msk [vmem:[#allocation2 + $0x29] sm:$0x1] %vm358, 0.0
      %372 = vst.msk [vmem:[#allocation2 + $0x39] sm:$0x1] %vm358, 0.0
      %373 = vst.msk [vmem:[#allocation2 + $0x49] sm:$0x1] %vm358, 0.0
      %374 = vst.msk [vmem:[#allocation2 + $0x59] sm:$0x1] %vm358, 0.0
      %375 = vst.msk [vmem:[#allocation2 + $0x69] sm:$0x1] %vm358, 0.0
      %376 = vst.msk [vmem:[#allocation2 + $0x79] sm:$0x1] %vm358, 0.0
      %377 = vst.msk [vmem:[#allocation2 + $0x89] sm:$0x1] %vm358, 0.0
      %378 = vst.msk [vmem:[#allocation2 + $0x99] sm:$0x1] %vm358, 0.0
      %s379 = scalar_lea.vmem [#allocation2], 16
      %380 = vst.msk [vmem:[%s379 + $0x1] sm:$0xff] %vm351, %v343
      %381 = vst.msk [vmem:[%s379 + $0x11] sm:$0xff] %vm351, %v344
      %382 = vst.msk [vmem:[%s379 + $0x21] sm:$0xff] %vm351, %v345
      %383 = vst.msk [vmem:[%s379 + $0x31] sm:$0xff] %vm351, %v346
      %384 = vst.msk [vmem:[%s379 + $0x41] sm:$0xff] %vm351, %v347
      %385 = vst.msk [vmem:[%s379 + $0x51] sm:$0xff] %vm351, %v348
      %386 = vst.msk [vmem:[%s379 + $0x61] sm:$0xff] %vm351, %v349
      %387 = vst.msk [vmem:[%s379 + $0x71] sm:$0xff] %vm351, %v350
      %v388 = vld [vmem:[#allocation2] sm:$0xff]
      %v389 = vld [vmem:[#allocation2 + $0x10] sm:$0xff]
      %v390 = vld [vmem:[#allocation2 + $0x20] sm:$0xff]
      %v391 = vld [vmem:[#allocation2 + $0x30] sm:$0xff]
      %v392 = vld [vmem:[#allocation2 + $0x40] sm:$0xff]
      %v393 = vld [vmem:[#allocation2 + $0x50] sm:$0xff]
      %v394 = vld [vmem:[#allocation2 + $0x60] sm:$0xff]
      %v395 = vld [vmem:[#allocation2 + $0x70] sm:$0xff]
      %v396 = vpack.c.bf16 %v388, %v388
      %v397 = vpack.c.bf16 %v389, %v389
      %v398 = vpack.c.bf16 %v390, %v390
      %v399 = vpack.c.bf16 %v391, %v391
      %v400 = vpack.c.bf16 %v392, %v392
      %v401 = vpack.c.bf16 %v393, %v393
      %v402 = vpack.c.bf16 %v394, %v394
      %v403 = vpack.c.bf16 %v395, %v395
      %vm404 = vcmask 27648
      %405 = vst.msk [vmem:[#allocation3] sm:$0xf] %vm404, %v396
      %406 = vst.msk [vmem:[#allocation3 + $0x4] sm:$0xf] %vm404, %v397
      %407 = vst.msk [vmem:[#allocation3 + $0x8] sm:$0xf] %vm404, %v398
      %408 = vst.msk [vmem:[#allocation3 + $0xc] sm:$0xf] %vm404, %v399
      %409 = vst.msk [vmem:[#allocation3 + $0x10] sm:$0xf] %vm404, %v400
      %410 = vst.msk [vmem:[#allocation3 + $0x14] sm:$0xf] %vm404, %v401
      %411 = vst.msk [vmem:[#allocation3 + $0x18] sm:$0xf] %vm404, %v402
      %412 = vst.msk [vmem:[#allocation3 + $0x1c] sm:$0xf] %vm404, %v403
      %v413 = vld [vmem:[#allocation2 + $0x1] sm:$0xff]
      %v414 = vld [vmem:[#allocation2 + $0x11] sm:$0xff]
      %v415 = vld [vmem:[#allocation2 + $0x21] sm:$0xff]
      %v416 = vld [vmem:[#allocation2 + $0x31] sm:$0xff]
      %v417 = vld [vmem:[#allocation2 + $0x41] sm:$0xff]
      %v418 = vld [vmem:[#allocation2 + $0x51] sm:$0xff]
      %v419 = vld [vmem:[#allocation2 + $0x61] sm:$0xff]
      %v420 = vld [vmem:[#allocation2 + $0x71] sm:$0xff]
      %v421 = vpack.c.bf16 %v413, %v413
      %v422 = vpack.c.bf16 %v414, %v414
      %v423 = vpack.c.bf16 %v415, %v415
      %v424 = vpack.c.bf16 %v416, %v416
      %v425 = vpack.c.bf16 %v417, %v417
      %v426 = vpack.c.bf16 %v418, %v418
      %v427 = vpack.c.bf16 %v419, %v419
      %v428 = vpack.c.bf16 %v420, %v420
      %437 = vrot.lane.b32.xlu0 %v421, 4
      %v438 = vpop.permute.xlu0 %437
      %439 = vrot.lane.b32.xlu0 %v422, 4
      %v440 = vpop.permute.xlu0 %439
      %441 = vrot.lane.b32.xlu0 %v423, 4
      %v442 = vpop.permute.xlu0 %441
      %443 = vrot.lane.b32.xlu0 %v424, 4
      %v444 = vpop.permute.xlu0 %443
      %445 = vrot.lane.b32.xlu0 %v425, 4
      %v446 = vpop.permute.xlu0 %445
      %447 = vrot.lane.b32.xlu0 %v426, 4
      %v448 = vpop.permute.xlu0 %447
      %449 = vrot.lane.b32.xlu0 %v427, 4
      %v450 = vpop.permute.xlu0 %449
      %451 = vrot.lane.b32.xlu0 %v428, 4
      %v452 = vpop.permute.xlu0 %451
      %vm461 = vcmask 60448
      %462 = vst.msk [vmem:[#allocation3] sm:$0xf] %vm461, %v438
      %463 = vst.msk [vmem:[#allocation3 + $0x4] sm:$0xf] %vm461, %v440
      %464 = vst.msk [vmem:[#allocation3 + $0x8] sm:$0xf] %vm461, %v442
      %465 = vst.msk [vmem:[#allocation3 + $0xc] sm:$0xf] %vm461, %v444
      %466 = vst.msk [vmem:[#allocation3 + $0x10] sm:$0xf] %vm461, %v446
      %467 = vst.msk [vmem:[#allocation3 + $0x14] sm:$0xf] %vm461, %v448
      %468 = vst.msk [vmem:[#allocation3 + $0x18] sm:$0xf] %vm461, %v450
      %469 = vst.msk [vmem:[#allocation3 + $0x1c] sm:$0xf] %vm461, %v452
      %v470 = vld [vmem:[#allocation2 + $0x2] sm:$0xff]
      %v471 = vld [vmem:[#allocation2 + $0x12] sm:$0xff]
      %v472 = vld [vmem:[#allocation2 + $0x22] sm:$0xff]
      %v473 = vld [vmem:[#allocation2 + $0x32] sm:$0xff]
      %v474 = vld [vmem:[#allocation2 + $0x42] sm:$0xff]
      %v475 = vld [vmem:[#allocation2 + $0x52] sm:$0xff]
      %v476 = vld [vmem:[#allocation2 + $0x62] sm:$0xff]
      %v477 = vld [vmem:[#allocation2 + $0x72] sm:$0xff]
      %v478 = vpack.c.bf16 %v470, %v470
      %v479 = vpack.c.bf16 %v471, %v471
      %v480 = vpack.c.bf16 %v472, %v472
      %v481 = vpack.c.bf16 %v473, %v473
      %v482 = vpack.c.bf16 %v474, %v474
      %v483 = vpack.c.bf16 %v475, %v475
      %v484 = vpack.c.bf16 %v476, %v476
      %v485 = vpack.c.bf16 %v477, %v477
      %494 = vrot.lane.b32.xlu0 %v478, 8
      %v495 = vpop.permute.xlu0 %494
      %496 = vrot.lane.b32.xlu0 %v479, 8
      %v497 = vpop.permute.xlu0 %496
      %498 = vrot.lane.b32.xlu0 %v480, 8
      %v499 = vpop.permute.xlu0 %498
      %500 = vrot.lane.b32.xlu0 %v481, 8
      %v501 = vpop.permute.xlu0 %500
      %502 = vrot.lane.b32.xlu0 %v482, 8
      %v503 = vpop.permute.xlu0 %502
      %504 = vrot.lane.b32.xlu0 %v483, 8
      %v505 = vpop.permute.xlu0 %504
      %506 = vrot.lane.b32.xlu0 %v484, 8
      %v507 = vpop.permute.xlu0 %506
      %508 = vrot.lane.b32.xlu0 %v485, 8
      %v509 = vpop.permute.xlu0 %508
      %vm518 = vcmask 93248
      %519 = vst.msk [vmem:[#allocation3] sm:$0xf] %vm518, %v495
      %520 = vst.msk [vmem:[#allocation3 + $0x4] sm:$0xf] %vm518, %v497
      %521 = vst.msk [vmem:[#allocation3 + $0x8] sm:$0xf] %vm518, %v499
      %522 = vst.msk [vmem:[#allocation3 + $0xc] sm:$0xf] %vm518, %v501
      %523 = vst.msk [vmem:[#allocation3 + $0x10] sm:$0xf] %vm518, %v503
      %524 = vst.msk [vmem:[#allocation3 + $0x14] sm:$0xf] %vm518, %v505
      %525 = vst.msk [vmem:[#allocation3 + $0x18] sm:$0xf] %vm518, %v507
      %526 = vst.msk [vmem:[#allocation3 + $0x1c] sm:$0xf] %vm518, %v509
      %v527 = vld [vmem:[%s379] sm:$0xff]
      %v528 = vld [vmem:[%s379 + $0x10] sm:$0xff]
      %v529 = vld [vmem:[%s379 + $0x20] sm:$0xff]
      %v530 = vld [vmem:[%s379 + $0x30] sm:$0xff]
      %v531 = vld [vmem:[%s379 + $0x40] sm:$0xff]
      %v532 = vld [vmem:[%s379 + $0x50] sm:$0xff]
      %v533 = vld [vmem:[%s379 + $0x60] sm:$0xff]
      %v534 = vld [vmem:[%s379 + $0x70] sm:$0xff]
      %v535 = vpack.c.bf16 %v527, %v527
      %v536 = vpack.c.bf16 %v528, %v528
      %v537 = vpack.c.bf16 %v529, %v529
      %v538 = vpack.c.bf16 %v530, %v530
      %v539 = vpack.c.bf16 %v531, %v531
      %v540 = vpack.c.bf16 %v532, %v532
      %v541 = vpack.c.bf16 %v533, %v533
      %v542 = vpack.c.bf16 %v534, %v534
      %551 = vrot.lane.b32.xlu0 %v535, 12
      %v552 = vpop.permute.xlu0 %551
      %553 = vrot.lane.b32.xlu0 %v536, 12
      %v554 = vpop.permute.xlu0 %553
      %555 = vrot.lane.b32.xlu0 %v537, 12
      %v556 = vpop.permute.xlu0 %555
      %557 = vrot.lane.b32.xlu0 %v538, 12
      %v558 = vpop.permute.xlu0 %557
      %559 = vrot.lane.b32.xlu0 %v539, 12
      %v560 = vpop.permute.xlu0 %559
      %561 = vrot.lane.b32.xlu0 %v540, 12
      %v562 = vpop.permute.xlu0 %561
      %563 = vrot.lane.b32.xlu0 %v541, 12
      %v564 = vpop.permute.xlu0 %563
      %565 = vrot.lane.b32.xlu0 %v542, 12
      %v566 = vpop.permute.xlu0 %565
      %vm575 = vcmask 126048
      %576 = vst.msk [vmem:[#allocation3] sm:$0xf] %vm575, %v552
      %577 = vst.msk [vmem:[#allocation3 + $0x4] sm:$0xf] %vm575, %v554
      %578 = vst.msk [vmem:[#allocation3 + $0x8] sm:$0xf] %vm575, %v556
      %579 = vst.msk [vmem:[#allocation3 + $0xc] sm:$0xf] %vm575, %v558
      %580 = vst.msk [vmem:[#allocation3 + $0x10] sm:$0xf] %vm575, %v560
      %581 = vst.msk [vmem:[#allocation3 + $0x14] sm:$0xf] %vm575, %v562
      %582 = vst.msk [vmem:[#allocation3 + $0x18] sm:$0xf] %vm575, %v564
      %583 = vst.msk [vmem:[#allocation3 + $0x1c] sm:$0xf] %vm575, %v566
      %v584 = vld [vmem:[%s379 + $0x1] sm:$0xff]
      %v585 = vld [vmem:[%s379 + $0x11] sm:$0xff]
      %v586 = vld [vmem:[%s379 + $0x21] sm:$0xff]
      %v587 = vld [vmem:[%s379 + $0x31] sm:$0xff]
      %v588 = vld [vmem:[%s379 + $0x41] sm:$0xff]
      %v589 = vld [vmem:[%s379 + $0x51] sm:$0xff]
      %v590 = vld [vmem:[%s379 + $0x61] sm:$0xff]
      %v591 = vld [vmem:[%s379 + $0x71] sm:$0xff]
      %v592 = vpack.c.bf16 %v584, %v584
      %v593 = vpack.c.bf16 %v585, %v585
      %v594 = vpack.c.bf16 %v586, %v586
      %v595 = vpack.c.bf16 %v587, %v587
      %v596 = vpack.c.bf16 %v588, %v588
      %v597 = vpack.c.bf16 %v589, %v589
      %v598 = vpack.c.bf16 %v590, %v590
      %v599 = vpack.c.bf16 %v591, %v591
      %608 = vrot.lane.b32.xlu0 %v592, 16
      %v609 = vpop.permute.xlu0 %608
      %610 = vrot.lane.b32.xlu0 %v593, 16
      %v611 = vpop.permute.xlu0 %610
      %612 = vrot.lane.b32.xlu0 %v594, 16
      %v613 = vpop.permute.xlu0 %612
      %614 = vrot.lane.b32.xlu0 %v595, 16
      %v615 = vpop.permute.xlu0 %614
      %616 = vrot.lane.b32.xlu0 %v596, 16
      %v617 = vpop.permute.xlu0 %616
      %618 = vrot.lane.b32.xlu0 %v597, 16
      %v619 = vpop.permute.xlu0 %618
      %620 = vrot.lane.b32.xlu0 %v598, 16
      %v621 = vpop.permute.xlu0 %620
      %622 = vrot.lane.b32.xlu0 %v599, 16
      %v623 = vpop.permute.xlu0 %622
      %vm632 = vcmask 158848
      %633 = vst.msk [vmem:[#allocation3] sm:$0xf] %vm632, %v609
      %634 = vst.msk [vmem:[#allocation3 + $0x4] sm:$0xf] %vm632, %v611
      %635 = vst.msk [vmem:[#allocation3 + $0x8] sm:$0xf] %vm632, %v613
      %636 = vst.msk [vmem:[#allocation3 + $0xc] sm:$0xf] %vm632, %v615
      %637 = vst.msk [vmem:[#allocation3 + $0x10] sm:$0xf] %vm632, %v617
      %638 = vst.msk [vmem:[#allocation3 + $0x14] sm:$0xf] %vm632, %v619
      %639 = vst.msk [vmem:[#allocation3 + $0x18] sm:$0xf] %vm632, %v621
      %640 = vst.msk [vmem:[#allocation3 + $0x1c] sm:$0xf] %vm632, %v623
      %v641 = vld [vmem:[%s379 + $0x2] sm:$0xff]
      %v642 = vld [vmem:[%s379 + $0x12] sm:$0xff]
      %v643 = vld [vmem:[%s379 + $0x22] sm:$0xff]
      %v644 = vld [vmem:[%s379 + $0x32] sm:$0xff]
      %v645 = vld [vmem:[%s379 + $0x42] sm:$0xff]
      %v646 = vld [vmem:[%s379 + $0x52] sm:$0xff]
      %v647 = vld [vmem:[%s379 + $0x62] sm:$0xff]
      %v648 = vld [vmem:[%s379 + $0x72] sm:$0xff]
      %v649 = vpack.c.bf16 %v641, %v641
      %v650 = vpack.c.bf16 %v642, %v642
      %v651 = vpack.c.bf16 %v643, %v643
      %v652 = vpack.c.bf16 %v644, %v644
      %v653 = vpack.c.bf16 %v645, %v645
      %v654 = vpack.c.bf16 %v646, %v646
      %v655 = vpack.c.bf16 %v647, %v647
      %v656 = vpack.c.bf16 %v648, %v648
      %665 = vrot.lane.b32.xlu0 %v649, 20
      %v666 = vpop.permute.xlu0 %665
      %667 = vrot.lane.b32.xlu0 %v650, 20
      %v668 = vpop.permute.xlu0 %667
      %669 = vrot.lane.b32.xlu0 %v651, 20
      %v670 = vpop.permute.xlu0 %669
      %671 = vrot.lane.b32.xlu0 %v652, 20
      %v672 = vpop.permute.xlu0 %671
      %673 = vrot.lane.b32.xlu0 %v653, 20
      %v674 = vpop.permute.xlu0 %673
      %675 = vrot.lane.b32.xlu0 %v654, 20
      %v676 = vpop.permute.xlu0 %675
      %677 = vrot.lane.b32.xlu0 %v655, 20
      %v678 = vpop.permute.xlu0 %677
      %679 = vrot.lane.b32.xlu0 %v656, 20
      %v680 = vpop.permute.xlu0 %679
      %vm689 = vcmask 191648
      %690 = vst.msk [vmem:[#allocation3] sm:$0xf] %vm689, %v666
      %691 = vst.msk [vmem:[#allocation3 + $0x4] sm:$0xf] %vm689, %v668
      %692 = vst.msk [vmem:[#allocation3 + $0x8] sm:$0xf] %vm689, %v670
      %693 = vst.msk [vmem:[#allocation3 + $0xc] sm:$0xf] %vm689, %v672
      %694 = vst.msk [vmem:[#allocation3 + $0x10] sm:$0xf] %vm689, %v674
      %695 = vst.msk [vmem:[#allocation3 + $0x14] sm:$0xf] %vm689, %v676
      %696 = vst.msk [vmem:[#allocation3 + $0x18] sm:$0xf] %vm689, %v678
      %697 = vst.msk [vmem:[#allocation3 + $0x1c] sm:$0xf] %vm689, %v680
      %s698 = scalar_lea.vmem [#allocation2], 32
      %v699 = vld [vmem:[%s698] sm:$0xff]
      %v700 = vld [vmem:[%s698 + $0x10] sm:$0xff]
      %v701 = vld [vmem:[%s698 + $0x20] sm:$0xff]
      %v702 = vld [vmem:[%s698 + $0x30] sm:$0xff]
      %v703 = vld [vmem:[%s698 + $0x40] sm:$0xff]
      %v704 = vld [vmem:[%s698 + $0x50] sm:$0xff]
      %v705 = vld [vmem:[%s698 + $0x60] sm:$0xff]
      %v706 = vld [vmem:[%s698 + $0x70] sm:$0xff]
      %v707 = vpack.c.bf16 %v699, %v699
      %v708 = vpack.c.bf16 %v700, %v700
      %v709 = vpack.c.bf16 %v701, %v701
      %v710 = vpack.c.bf16 %v702, %v702
      %v711 = vpack.c.bf16 %v703, %v703
      %v712 = vpack.c.bf16 %v704, %v704
      %v713 = vpack.c.bf16 %v705, %v705
      %v714 = vpack.c.bf16 %v706, %v706
      %723 = vrot.lane.b32.xlu0 %v707, 24
      %v724 = vpop.permute.xlu0 %723
      %725 = vrot.lane.b32.xlu0 %v708, 24
      %v726 = vpop.permute.xlu0 %725
      %727 = vrot.lane.b32.xlu0 %v709, 24
      %v728 = vpop.permute.xlu0 %727
      %729 = vrot.lane.b32.xlu0 %v710, 24
      %v730 = vpop.permute.xlu0 %729
      %731 = vrot.lane.b32.xlu0 %v711, 24
      %v732 = vpop.permute.xlu0 %731
      %733 = vrot.lane.b32.xlu0 %v712, 24
      %v734 = vpop.permute.xlu0 %733
      %735 = vrot.lane.b32.xlu0 %v713, 24
      %v736 = vpop.permute.xlu0 %735
      %737 = vrot.lane.b32.xlu0 %v714, 24
      %v738 = vpop.permute.xlu0 %737
      %vm747 = vcmask 224448
      %748 = vst.msk [vmem:[#allocation3] sm:$0xf] %vm747, %v724
      %749 = vst.msk [vmem:[#allocation3 + $0x4] sm:$0xf] %vm747, %v726
      %750 = vst.msk [vmem:[#allocation3 + $0x8] sm:$0xf] %vm747, %v728
      %751 = vst.msk [vmem:[#allocation3 + $0xc] sm:$0xf] %vm747, %v730
      %752 = vst.msk [vmem:[#allocation3 + $0x10] sm:$0xf] %vm747, %v732
      %753 = vst.msk [vmem:[#allocation3 + $0x14] sm:$0xf] %vm747, %v734
      %754 = vst.msk [vmem:[#allocation3 + $0x18] sm:$0xf] %vm747, %v736
      %755 = vst.msk [vmem:[#allocation3 + $0x1c] sm:$0xf] %vm747, %v738
      %v756 = vld [vmem:[%s698 + $0x1] sm:$0xff]
      %v757 = vld [vmem:[%s698 + $0x11] sm:$0xff]
      %v758 = vld [vmem:[%s698 + $0x21] sm:$0xff]
      %v759 = vld [vmem:[%s698 + $0x31] sm:$0xff]
      %v760 = vld [vmem:[%s698 + $0x41] sm:$0xff]
      %v761 = vld [vmem:[%s698 + $0x51] sm:$0xff]
      %v762 = vld [vmem:[%s698 + $0x61] sm:$0xff]
      %v763 = vld [vmem:[%s698 + $0x71] sm:$0xff]
      %v764 = vpack.c.bf16 %v756, %v756
      %v765 = vpack.c.bf16 %v757, %v757
      %v766 = vpack.c.bf16 %v758, %v758
      %v767 = vpack.c.bf16 %v759, %v759
      %v768 = vpack.c.bf16 %v760, %v760
      %v769 = vpack.c.bf16 %v761, %v761
      %v770 = vpack.c.bf16 %v762, %v762
      %v771 = vpack.c.bf16 %v763, %v763
      %780 = vrot.lane.b32.xlu0 %v764, 28
      %v781 = vpop.permute.xlu0 %780
      %782 = vrot.lane.b32.xlu0 %v765, 28
      %v783 = vpop.permute.xlu0 %782
      %784 = vrot.lane.b32.xlu0 %v766, 28
      %v785 = vpop.permute.xlu0 %784
      %786 = vrot.lane.b32.xlu0 %v767, 28
      %v787 = vpop.permute.xlu0 %786
      %788 = vrot.lane.b32.xlu0 %v768, 28
      %v789 = vpop.permute.xlu0 %788
      %790 = vrot.lane.b32.xlu0 %v769, 28
      %v791 = vpop.permute.xlu0 %790
      %792 = vrot.lane.b32.xlu0 %v770, 28
      %v793 = vpop.permute.xlu0 %792
      %794 = vrot.lane.b32.xlu0 %v771, 28
      %v795 = vpop.permute.xlu0 %794
      %vm804 = vcmask 257248
      %805 = vst.msk [vmem:[#allocation3] sm:$0xf] %vm804, %v781
      %806 = vst.msk [vmem:[#allocation3 + $0x4] sm:$0xf] %vm804, %v783
      %807 = vst.msk [vmem:[#allocation3 + $0x8] sm:$0xf] %vm804, %v785
      %808 = vst.msk [vmem:[#allocation3 + $0xc] sm:$0xf] %vm804, %v787
      %809 = vst.msk [vmem:[#allocation3 + $0x10] sm:$0xf] %vm804, %v789
      %810 = vst.msk [vmem:[#allocation3 + $0x14] sm:$0xf] %vm804, %v791
      %811 = vst.msk [vmem:[#allocation3 + $0x18] sm:$0xf] %vm804, %v793
      %812 = vst.msk [vmem:[#allocation3 + $0x1c] sm:$0xf] %vm804, %v795
      %v813 = vld [vmem:[%s698 + $0x2] sm:$0xff]
      %v814 = vld [vmem:[%s698 + $0x12] sm:$0xff]
      %v815 = vld [vmem:[%s698 + $0x22] sm:$0xff]
      %v816 = vld [vmem:[%s698 + $0x32] sm:$0xff]
      %v817 = vld [vmem:[%s698 + $0x42] sm:$0xff]
      %v818 = vld [vmem:[%s698 + $0x52] sm:$0xff]
      %v819 = vld [vmem:[%s698 + $0x62] sm:$0xff]
      %v820 = vld [vmem:[%s698 + $0x72] sm:$0xff]
      %v821 = vpack.c.bf16 %v813, %v813
      %v822 = vpack.c.bf16 %v814, %v814
      %v823 = vpack.c.bf16 %v815, %v815
      %v824 = vpack.c.bf16 %v816, %v816
      %v825 = vpack.c.bf16 %v817, %v817
      %v826 = vpack.c.bf16 %v818, %v818
      %v827 = vpack.c.bf16 %v819, %v819
      %v828 = vpack.c.bf16 %v820, %v820
      %837 = vrot.lane.b32.xlu0 %v821, 32
      %v838 = vpop.permute.xlu0 %837
      %839 = vrot.lane.b32.xlu0 %v822, 32
      %v840 = vpop.permute.xlu0 %839
      %841 = vrot.lane.b32.xlu0 %v823, 32
      %v842 = vpop.permute.xlu0 %841
      %843 = vrot.lane.b32.xlu0 %v824, 32
      %v844 = vpop.permute.xlu0 %843
      %845 = vrot.lane.b32.xlu0 %v825, 32
      %v846 = vpop.permute.xlu0 %845
      %847 = vrot.lane.b32.xlu0 %v826, 32
      %v848 = vpop.permute.xlu0 %847
      %849 = vrot.lane.b32.xlu0 %v827, 32
      %v850 = vpop.permute.xlu0 %849
      %851 = vrot.lane.b32.xlu0 %v828, 32
      %v852 = vpop.permute.xlu0 %851
      %vm861 = vcmask 290048
      %862 = vst.msk [vmem:[#allocation3] sm:$0xf] %vm861, %v838
      %863 = vst.msk [vmem:[#allocation3 + $0x4] sm:$0xf] %vm861, %v840
      %864 = vst.msk [vmem:[#allocation3 + $0x8] sm:$0xf] %vm861, %v842
      %865 = vst.msk [vmem:[#allocation3 + $0xc] sm:$0xf] %vm861, %v844
      %866 = vst.msk [vmem:[#allocation3 + $0x10] sm:$0xf] %vm861, %v846
      %867 = vst.msk [vmem:[#allocation3 + $0x14] sm:$0xf] %vm861, %v848
      %868 = vst.msk [vmem:[#allocation3 + $0x18] sm:$0xf] %vm861, %v850
      %869 = vst.msk [vmem:[#allocation3 + $0x1c] sm:$0xf] %vm861, %v852
      %v870 = vld [vmem:[#allocation3] sm:$0xf]
      %v871 = vld [vmem:[#allocation3 + $0x4] sm:$0xf]
      %v872 = vld [vmem:[#allocation3 + $0x8] sm:$0xf]
      %v873 = vld [vmem:[#allocation3 + $0xc] sm:$0xf]
      %v874 = vld [vmem:[#allocation3 + $0x10] sm:$0xf]
      %v875 = vld [vmem:[#allocation3 + $0x14] sm:$0xf]
      %v876 = vld [vmem:[#allocation3 + $0x18] sm:$0xf]
      %v877 = vld [vmem:[#allocation3 + $0x1c] sm:$0xf]
      %v878 = vld [vmem:[%s1] sm:$0xf]
      %v879 = vld [vmem:[%s1 + $0x4] sm:$0xf]
      %v880 = vld [vmem:[%s1 + $0x8] sm:$0xf]
      %v881 = vld [vmem:[%s1 + $0xc] sm:$0xf]
      %v882 = vld [vmem:[%s1 + $0x10] sm:$0x3]
      %v883 = vld [vmem:[%s2] sm:$0x1]
      %v885 = vperm.slane %v883, 0
      %v895 = vunpack.c.l.b16 %v870
      %v896 = vunpack.c.l.b16 %v871
      %v897 = vunpack.c.l.b16 %v872
      %v898 = vunpack.c.l.b16 %v873
      %v899 = vunpack.c.l.b16 %v874
      %v900 = vunpack.c.l.b16 %v875
      %v901 = vunpack.c.l.b16 %v876
      %v902 = vunpack.c.l.b16 %v877
      %v903 = vpack.c.b16 %v896, %v895
      %v904 = vpack.c.b16 %v898, %v897
      %v905 = vpack.c.b16 %v900, %v899
      %v906 = vpack.c.b16 %v902, %v901
      %v912 = vunpack.c.l.b16 %v878
      %v913 = vunpack.c.l.b16 %v879
      %v914 = vunpack.c.l.b16 %v880
      %v915 = vunpack.c.l.b16 %v881
      %v916 = vunpack.c.l.b16 %v882
      %v917 = vpack.c.b16 %v913, %v912
      %v918 = vpack.c.b16 %v915, %v914
      %v919 = vpack.c.b16 %v916, %v916
      %vm922 = vcmask 293888
      %v924 = vsel %vm922, %v903, 0
      %v927 = vsel %vm922, %v904, 0
      %v930 = vsel %vm922, %v905, 0
      %v933 = vsel %vm922, %v906, 0
      %vm935 = vcmask 1041408
      %v937 = vsel %vm935, %v919, 0
      %939 = vmatpush.bf16.msra.mxu0 0
      %940 = vmatpush.bf16.msra.mxu0 0
      %941 = vmatpush.bf16.msra.mxu0 0
      %942 = vmatpush.bf16.msra.mxu0 0
      %943 = vmatpush.bf16.msra.mxu0 0
      %944 = vmatpush.bf16.msra.mxu0 %v937
      %945 = vmatpush.bf16.msra.mxu0 %v918
      %946 = vmatpush.bf16.msra.mxu0 %v917
      %947 = vmatmul.bf16.gmra.mxu0 %v924
      %v948 = vpop.f32.mrf.mxu0
      %v949 = vadd.f32 %v885, %v948
      %v950 = vpop.f32.mrf.mxu0
      %v951 = vadd.f32 %v885, %v950
      %952 = vmatmul.bf16.gmra.mxu0 %v927
      %v953 = vpop.f32.mrf.mxu0
      %v954 = vadd.f32 %v885, %v953
      %v955 = vpop.f32.mrf.mxu0
      %v956 = vadd.f32 %v885, %v955
      %957 = vmatmul.bf16.gmra.mxu0 %v930
      %v958 = vpop.f32.mrf.mxu0
      %v959 = vadd.f32 %v885, %v958
      %v960 = vpop.f32.mrf.mxu0
      %v961 = vadd.f32 %v885, %v960
      %962 = vmatmul.bf16.gmra.mxu0 %v933
      %v963 = vpop.f32.mrf.mxu0
      %v964 = vadd.f32 %v885, %v963
      %v965 = vpop.f32.mrf.mxu0
      %v966 = vadd.f32 %v885, %v965
      %967 = vdwg.mxu0
      %vm968 = vcmask 64512
      %v969 = vsel %vm968, %v949, 0.0
      %v970 = vsel %vm968, %v951, 0.0
      %v971 = vadd.f32 %v969, %v970
      %v972 = vsel %vm968, %v954, 0.0
      %v973 = vadd.f32 %v971, %v972
      %v974 = vsel %vm968, %v956, 0.0
      %v975 = vadd.f32 %v973, %v974
      %v976 = vsel %vm968, %v959, 0.0
      %v977 = vadd.f32 %v975, %v976
      %v978 = vsel %vm968, %v961, 0.0
      %v979 = vadd.f32 %v977, %v978
      %v980 = vsel %vm968, %v964, 0.0
      %v981 = vadd.f32 %v979, %v980
      %v982 = vsel %vm968, %v966, 0.0
      %v983 = vadd.f32 %v981, %v982
      %v984 = vrot.slane %v983, 4
      %v985 = vadd.f32 %v983, %v984
      %v986 = vrot.slane %v985, 2
      %v987 = vadd.f32 %v985, %v986
      %v988 = vrot.slane %v987, 1
      %v989 = vadd.f32 %v987, %v988
      %vm990 = vcmask 57344
      %991 = vst.msk [vmem:[%s262] sm:$0x1] %vm990, %v989
      %v992 = vmul.f32 %v949, %v949
      %v993 = vmul.f32 %v951, %v951
      %v994 = vmul.f32 %v954, %v954
      %v995 = vmul.f32 %v956, %v956
      %v996 = vmul.f32 %v959, %v959
      %v997 = vmul.f32 %v961, %v961
      %v998 = vmul.f32 %v964, %v964
      %v999 = vmul.f32 %v966, %v966
      %v1000 = vsel %vm968, %v992, 0.0
      %v1001 = vsel %vm968, %v993, 0.0
      %v1002 = vadd.f32 %v1000, %v1001
      %v1003 = vsel %vm968, %v994, 0.0
      %v1004 = vadd.f32 %v1002, %v1003
      %v1005 = vsel %vm968, %v995, 0.0
      %v1006 = vadd.f32 %v1004, %v1005
      %v1007 = vsel %vm968, %v996, 0.0
      %v1008 = vadd.f32 %v1006, %v1007
      %v1009 = vsel %vm968, %v997, 0.0
      %v1010 = vadd.f32 %v1008, %v1009
      %v1011 = vsel %vm968, %v998, 0.0
      %v1012 = vadd.f32 %v1010, %v1011
      %v1013 = vsel %vm968, %v999, 0.0
      %v1014 = vadd.f32 %v1012, %v1013
      %v1015 = vrot.slane %v1014, 4
      %v1016 = vadd.f32 %v1014, %v1015
      %v1017 = vrot.slane %v1016, 2
      %v1018 = vadd.f32 %v1016, %v1017
      %v1019 = vrot.slane %v1018, 1
      %v1020 = vadd.f32 %v1018, %v1019
      %1021 = vst.msk [vmem:[%s262 + $0x1] sm:$0x1] %vm990, %v1020
      %v1022 = vpack.c.bf16 %v949, %v949
      %v1023 = vpack.c.bf16 %v951, %v951
      %v1024 = vpack.c.bf16 %v954, %v954
      %v1025 = vpack.c.bf16 %v956, %v956
      %v1026 = vpack.c.bf16 %v959, %v959
      %v1027 = vpack.c.bf16 %v961, %v961
      %v1028 = vpack.c.bf16 %v964, %v964
      %v1029 = vpack.c.bf16 %v966, %v966
      %vm1030 = vcmask 60416
      %1031 = vst.msk [vmem:[%s258] sm:$0xf] %vm1030, %v1022
      %1032 = vst.msk [vmem:[%s258 + $0x4] sm:$0xf] %vm1030, %v1023
      %1033 = vst.msk [vmem:[%s258 + $0x8] sm:$0xf] %vm1030, %v1024
      %1034 = vst.msk [vmem:[%s258 + $0xc] sm:$0xf] %vm1030, %v1025
      %1035 = vst.msk [vmem:[%s258 + $0x10] sm:$0xf] %vm1030, %v1026
      %1036 = vst.msk [vmem:[%s258 + $0x14] sm:$0xf] %vm1030, %v1027
      %1037 = vst.msk [vmem:[%s258 + $0x18] sm:$0xf] %vm1030, %v1028
      %1038 = vst.msk [vmem:[%s258 + $0x1c] sm:$0xf] %vm1030, %v1029
      %p1039 = scmp.lt.s32.totalorder %s18, 1
      %s1040 = scalar_select %p1039, %s18, 1
      %s1041 = smul.addr %s1040, 8
      %s1042 = smul.addr %s1041, 4
      %s1043 = scalar_lea.vmem %s5, %s1042
      %p1044 = scmp.lt.s32.totalorder %s18, 1
      %s1045 = scalar_select %p1044, %s18, 1
      %s1046 = smul.addr %s1045, 2
      %s1047 = scalar_lea.vmem %s6, %s1046
      // Predicated region
      $region41: #{down_block.3} parent=39 // pred_check
        %p1048 = pneg %p146
      $region42: #{down_block.3} parent=39 // pred_check_branch
        %1050 = sbr.rel (%p1048) target = $region44
      $region43: #{down_block.3} parent=39 // pred_region
        _
      $region44: #{down_block.3} parent=39 // pred_fallthru
        _
      // Predicated region
      $region45: #{down_block.3} parent=39 // pred_check
        %p1051 = pneg %p172
      $region46: #{down_block.3} parent=39 // pred_check_branch
        %1053 = sbr.rel (%p1051) target = $region48
      $region47: #{down_block.3} parent=39 // pred_region
        _
      $region48: #{down_block.3} parent=39 // pred_fallthru
        _
    $region40: #{down_block.3} parent=5 // pred_fallthru
      _
    %p1054 = scmp.le.s32.totalorder 2, %s13
    // Predicated region
    $region49: #{down_block.3} parent=5 // pred_check
      %p1055 = pneg %p1054
    $region50: #{down_block.3} parent=5 // pred_check_branch
      %1057 = sbr.rel (%p1055) target = $region52
    $region51: #{down_block.3} parent=5 // pred_region
      %s1058 = ssub.s32 %s13, 2
      // Predicated region
      $region53: #{down_block.3} parent=51 // pred_check
        %p1059 = pneg %p152
      $region54: #{down_block.3} parent=51 // pred_check_branch
        %1061 = sbr.rel (%p1059) target = $region56
      $region55: #{down_block.3} parent=51 // pred_region
        %p1062 = scmp.lt.s32.totalorder %s19, 1
        %s1063 = scalar_select %p1062, %s19, 1
        %s1064 = smul.addr %s1063, 8
        %s1065 = smul.addr %s1064, 4
        %s1066 = scalar_lea.vmem %s5, %s1065
      $region56: #{down_block.3} parent=51 // pred_fallthru
        _
      // Predicated region
      $region57: #{down_block.3} parent=51 // pred_check
        %p1067 = pneg %p178
      $region58: #{down_block.3} parent=51 // pred_check_branch
        %1069 = sbr.rel (%p1067) target = $region60
      $region59: #{down_block.3} parent=51 // pred_region
        %p1070 = scmp.lt.s32.totalorder %s19, 1
        %s1071 = scalar_select %p1070, %s19, 1
        %s1072 = smul.addr %s1071, 2
        %s1073 = scalar_lea.vmem %s6, %s1072
      $region60: #{down_block.3} parent=51 // pred_fallthru
        _
    $region52: #{down_block.3} parent=5 // pred_fallthru
      _
  $region6: #{down_block.3} parent=0 // loop_footer
    %s17 = sadd.s32 1, %s13
  $region7: #{down_block.3} parent=0 // loop_footer_branch
    %12 = sbr.rel target = $region3
  $region8: #{down_block.3} parent=0 // loop_exit
    _

// kernel: down_block.4
$region0: #{down_block.4}
  #allocation0 [shape = 'u32[]', space=smem, size = 0x4, offset = 0x4, fixed_abs, tag = 'smem constant byte address 0x4 - core index']
  #allocation1 [shape = 'u32[72,128]{1,0:T(1,128)}', space=vmem, size = 0x9000, scoped, tag = 'internal scratch']
  #allocation2 [shape = 'f32[10,16,8]{2,1,0:T(8,128)}', space=vmem, size = 0x14000, scoped, tag = 'scratch operand']
  #allocation3 [shape = 'bf16[64,72]{1,0:T(8,128)(2,1)}', space=vmem, size = 0x4000, scoped, tag = 'scratch operand']
  %s0 = inlined_call_operand.vmem [shape: bf16[2,8,8,8], index: 0, kind: input, shape index: {}]
  %s1 = inlined_call_operand.vmem [shape: bf16[72,8], index: 1, kind: input, shape index: {}]
  %s2 = inlined_call_operand.vmem [shape: f32[1,8], index: 2, kind: input, shape index: {}]
  %s3 = inlined_call_operand.vmem [shape: f32[1,8], index: 3, kind: input, shape index: {}]
  %s4 = inlined_call_operand.vmem [shape: f32[1,8], index: 4, kind: input, shape index: {}]
  %s5 = inlined_call_operand.vmem [shape: bf16[2,8,8,8], index: 5, kind: output, shape index: {0}]
  %s6 = inlined_call_operand.vmem [shape: f32[2,2,8], index: 6, kind: output, shape index: {1}]
  %7 = xla_tuple %s5, %s6
  %s8 = sld [smem:[#allocation0]]
  $region61: #{down_block.4} parent=0
    _
  %s10 = ssub.s32 1, %s8
  %s11 = scalar_select 0, %s10, %s8
  loop: start=0, step=1, limit=4
  $region2: #{down_block.4} parent=0 // loop_pre_header
    _
  $region3: #{down_block.4} parent=0 // loop_header
    %s13 = sphi 0, %s17
    %p14 = scmp.ge.s32.totalorder %s13, 4
    %s23 = sphi 0, %s25
    %s26 = sphi 0, %s23
    %s27 = sphi 0, %s26
    %s43 = sphi 0, %s27
    %s47 = sphi 0, %s47
    %s49 = sphi 0, %s47
    %s50 = sphi 0, %s49
    %s64 = sphi 0, %s50
    %s68 = sphi 0, %s68
    %s70 = sphi 0, %s68
    %s71 = sphi 0, %s70
    %s85 = sphi 0, %s71
    %s89 = sphi 0, %s89
    %s91 = sphi 0, %s89
    %s92 = sphi 0, %s91
    %s106 = sphi 0, %s92
    %s110 = sphi 0, %s110
    %s112 = sphi 0, %s110
    %s113 = sphi 0, %s112
    %s127 = sphi 0, %s113
    %s133 = sphi 0, %s135
    %s136 = sphi 0, %s133
    %s137 = sphi 0, %s136
    %s153 = sphi 0, %s137
    %s159 = sphi 0, %s161
    %s162 = sphi 0, %s159
    %s163 = sphi 0, %s162
    %s179 = sphi 0, %s163
  $region4: #{down_block.4} parent=0 // loop_header_branch
    %16 = sbr.rel (%p14) target = $region8
  $region5: #{down_block.4} parent=0 // loop_body
    %s18 = ssub.s32 %s13, 1
    %s19 = ssub.s32 %s13, 2
    %s20 = sadd.s32 %s13, 1
    %s21 = ssub.s32 %s13, %s20
    %p22 = scmp.eq.s32.totalorder %s21, 0
    %s24 = sadd.s32 %s23, 1
    %s25 = scalar_select %p22, %s23, %s24
    %p28 = pneg %p22
    %p29 = scmp.eq.s32.totalorder %s13, 1
    %p30 = por %p28, %p29
    %p31 = scmp.ne.s32.totalorder %s23, %s26
    %p32 = scmp.eq.s32.totalorder %s13, 0
    %p33 = por %p31, %p32
    %p34 = scmp.ne.s32.totalorder %s23, %s26
    %p35 = scmp.eq.s32.totalorder %s18, 1
    %p36 = por %p34, %p35
    %p37 = scmp.ne.s32.totalorder %s26, %s27
    %p38 = scmp.eq.s32.totalorder %s18, 0
    %p39 = por %p37, %p38
    %p40 = scmp.ne.s32.totalorder %s26, %s27
    %p41 = scmp.eq.s32.totalorder %s19, 1
    %p42 = por %p40, %p41
    %p44 = scmp.ne.s32.totalorder %s27, %s43
    %p45 = scmp.eq.s32.totalorder %s19, 0
    %p46 = por %p44, %p45
    %s48 = sadd.s32 %s47, 1
    %p51 = scmp.eq.s32.totalorder %s13, 1
    %p52 = scmp.ne.s32.totalorder %s47, %s49
    %p53 = scmp.eq.s32.totalorder %s13, 0
    %p54 = por %p52, %p53
    %p55 = scmp.ne.s32.totalorder %s47, %s49
    %p56 = scmp.eq.s32.totalorder %s18, 1
    %p57 = por %p55, %p56
    %p58 = scmp.ne.s32.totalorder %s49, %s50
    %p59 = scmp.eq.s32.totalorder %s18, 0
    %p60 = por %p58, %p59
    %p61 = scmp.ne.s32.totalorder %s49, %s50
    %p62 = scmp.eq.s32.totalorder %s19, 1
    %p63 = por %p61, %p62
    %p65 = scmp.ne.s32.totalorder %s50, %s64
    %p66 = scmp.eq.s32.totalorder %s19, 0
    %p67 = por %p65, %p66
    %s69 = sadd.s32 %s68, 1
    %p72 = scmp.eq.s32.totalorder %s13, 1
    %p73 = scmp.ne.s32.totalorder %s68, %s70
    %p74 = scmp.eq.s32.totalorder %s13, 0
    %p75 = por %p73, %p74
    %p76 = scmp.ne.s32.totalorder %s68, %s70
    %p77 = scmp.eq.s32.totalorder %s18, 1
    %p78 = por %p76, %p77
    %p79 = scmp.ne.s32.totalorder %s70, %s71
    %p80 = scmp.eq.s32.totalorder %s18, 0
    %p81 = por %p79, %p80
    %p82 = scmp.ne.s32.totalorder %s70, %s71
    %p83 = scmp.eq.s32.totalorder %s19, 1
    %p84 = por %p82, %p83
    %p86 = scmp.ne.s32.totalorder %s71, %s85
    %p87 = scmp.eq.s32.totalorder %s19, 0
    %p88 = por %p86, %p87
    %s90 = sadd.s32 %s89, 1
    %p93 = scmp.eq.s32.totalorder %s13, 1
    %p94 = scmp.ne.s32.totalorder %s89, %s91
    %p95 = scmp.eq.s32.totalorder %s13, 0
    %p96 = por %p94, %p95
    %p97 = scmp.ne.s32.totalorder %s89, %s91
    %p98 = scmp.eq.s32.totalorder %s18, 1
    %p99 = por %p97, %p98
    %p100 = scmp.ne.s32.totalorder %s91, %s92
    %p101 = scmp.eq.s32.totalorder %s18, 0
    %p102 = por %p100, %p101
    %p103 = scmp.ne.s32.totalorder %s91, %s92
    %p104 = scmp.eq.s32.totalorder %s19, 1
    %p105 = por %p103, %p104
    %p107 = scmp.ne.s32.totalorder %s92, %s106
    %p108 = scmp.eq.s32.totalorder %s19, 0
    %p109 = por %p107, %p108
    %s111 = sadd.s32 %s110, 1
    %p114 = scmp.eq.s32.totalorder %s13, 1
    %p115 = scmp.ne.s32.totalorder %s110, %s112
    %p116 = scmp.eq.s32.totalorder %s13, 0
    %p117 = por %p115, %p116
    %p118 = scmp.ne.s32.totalorder %s110, %s112
    %p119 = scmp.eq.s32.totalorder %s18, 1
    %p120 = por %p118, %p119
    %p121 = scmp.ne.s32.totalorder %s112, %s113
    %p122 = scmp.eq.s32.totalorder %s18, 0
    %p123 = por %p121, %p122
    %p124 = scmp.ne.s32.totalorder %s112, %s113
    %p125 = scmp.eq.s32.totalorder %s19, 1
    %p126 = por %p124, %p125
    %p128 = scmp.ne.s32.totalorder %s113, %s127
    %p129 = scmp.eq.s32.totalorder %s19, 0
    %p130 = por %p128, %p129
    %s131 = ssub.s32 %s13, %s20
    %p132 = scmp.eq.s32.totalorder %s131, 0
    %s134 = sadd.s32 %s133, 1
    %s135 = scalar_select %p132, %s133, %s134
    %p138 = pneg %p132
    %p139 = scmp.eq.s32.totalorder %s13, 1
    %p140 = por %p138, %p139
    %p141 = scmp.ne.s32.totalorder %s133, %s136
    %p142 = scmp.eq.s32.totalorder %s13, 0
    %p143 = por %p141, %p142
    %p144 = scmp.ne.s32.totalorder %s133, %s136
    %p145 = scmp.eq.s32.totalorder %s18, 1
    %p146 = por %p144, %p145
    %p147 = scmp.ne.s32.totalorder %s136, %s137
    %p148 = scmp.eq.s32.totalorder %s18, 0
    %p149 = por %p147, %p148
    %p150 = scmp.ne.s32.totalorder %s136, %s137
    %p151 = scmp.eq.s32.totalorder %s19, 1
    %p152 = por %p150, %p151
    %p154 = scmp.ne.s32.totalorder %s137, %s153
    %p155 = scmp.eq.s32.totalorder %s19, 0
    %p156 = por %p154, %p155
    %s157 = ssub.s32 %s13, %s20
    %p158 = scmp.eq.s32.totalorder %s157, 0
    %s160 = sadd.s32 %s159, 1
    %s161 = scalar_select %p158, %s159, %s160
    %p164 = pneg %p158
    %p165 = scmp.eq.s32.totalorder %s13, 1
    %p166 = por %p164, %p165
    %p167 = scmp.ne.s32.totalorder %s159, %s162
    %p168 = scmp.eq.s32.totalorder %s13, 0
    %p169 = por %p167, %p168
    %p170 = scmp.ne.s32.totalorder %s159, %s162
    %p171 = scmp.eq.s32.totalorder %s18, 1
    %p172 = por %p170, %p171
    %p173 = scmp.ne.s32.totalorder %s162, %s163
    %p174 = scmp.eq.s32.totalorder %s18, 0
    %p175 = por %p173, %p174
    %p176 = scmp.ne.s32.totalorder %s162, %s163
    %p177 = scmp.eq.s32.totalorder %s19, 1
    %p178 = por %p176, %p177
    %p180 = scmp.ne.s32.totalorder %s163, %s179
    %p181 = scmp.eq.s32.totalorder %s19, 0
    %p182 = por %p180, %p181
    %p183 = scmp.le.s32.totalorder 1, %s13
    %p184 = scmp.lt.s32.totalorder %s13, 3
    %p185 = pnand %p183, %p184
    %p186 = pneg %p185
    // Predicated region
    $region9: #{down_block.4} parent=5 // pred_check
      _
    $region10: #{down_block.4} parent=5 // pred_check_branch
      %188 = sbr.rel (%p185) target = $region12
    $region11: #{down_block.4} parent=5 // pred_region
      %s189 = ssub.s32 %s13, 1
      // Predicated region
      $region13: #{down_block.4} parent=11 // pred_check
        %p190 = pneg %p60
      $region14: #{down_block.4} parent=11 // pred_check_branch
        %192 = sbr.rel (%p190) target = $region16
      $region15: #{down_block.4} parent=11 // pred_region
        _
      $region16: #{down_block.4} parent=11 // pred_fallthru
        _
      // Predicated region
      $region17: #{down_block.4} parent=11 // pred_check
        %p193 = pneg %p81
      $region18: #{down_block.4} parent=11 // pred_check_branch
        %195 = sbr.rel (%p193) target = $region20
      $region19: #{down_block.4} parent=11 // pred_region
        _
      $region20: #{down_block.4} parent=11 // pred_fallthru
        _
      // Predicated region
      $region21: #{down_block.4} parent=11 // pred_check
        %p196 = pneg %p102
      $region22: #{down_block.4} parent=11 // pred_check_branch
        %198 = sbr.rel (%p196) target = $region24
      $region23: #{down_block.4} parent=11 // pred_region
        _
      $region24: #{down_block.4} parent=11 // pred_fallthru
        _
      // Predicated region
      $region25: #{down_block.4} parent=11 // pred_check
        %p199 = pneg %p123
      $region26: #{down_block.4} parent=11 // pred_check_branch
        %201 = sbr.rel (%p199) target = $region28
      $region27: #{down_block.4} parent=11 // pred_region
        _
      $region28: #{down_block.4} parent=11 // pred_fallthru
        _
    $region12: #{down_block.4} parent=5 // pred_fallthru
      _
    %p202 = scmp.lt.s32.totalorder %s13, 2
    // Predicated region
    $region29: #{down_block.4} parent=5 // pred_check
      %p203 = pneg %p202
    $region30: #{down_block.4} parent=5 // pred_check_branch
      %205 = sbr.rel (%p203) target = $region32
    $region31: #{down_block.4} parent=5 // pred_region
      // Predicated region
      $region33: #{down_block.4} parent=31 // pred_check
        %p206 = pneg %p33
      $region34: #{down_block.4} parent=31 // pred_check_branch
        %208 = sbr.rel (%p206) target = $region36
      $region35: #{down_block.4} parent=31 // pred_region
        %p209 = scmp.lt.s32.totalorder %s13, 1
        %s210 = scalar_select %p209, %s13, 1
        %s211 = smul.addr %s210, 8
        %s212 = smul.addr %s211, 4
        %s213 = scalar_lea.vmem %s0, %s212
      $region36: #{down_block.4} parent=31 // pred_fallthru
        _
    $region32: #{down_block.4} parent=5 // pred_fallthru
      _
    %p214 = scmp.le.s32.totalorder 1, %s13
    %p215 = scmp.lt.s32.totalorder %s13, 3
    %p216 = pnand %p214, %p215
    %p217 = pneg %p216
    // Predicated region
    $region37: #{down_block.4} parent=5 // pred_check
      _
    $region38: #{down_block.4} parent=5 // pred_check_branch
      %219 = sbr.rel (%p216) target = $region40
    $region39: #{down_block.4} parent=5 // pred_region
      %s220 = ssub.s32 %s13, 1
      %p221 = scmp.lt.s32.totalorder %s18, 1
      %s222 = scalar_select %p221, %s18, 1
      %s223 = smul.addr %s222, 8
      %s224 = smul.addr %s223, 4
      %s225 = scalar_lea.vmem %s0, %s224
      %p226 = pneg %p39
      %p227 = pneg %p36
      %p228 = pneg %p60
      %p229 = pneg %p57
      %p230 = pneg %p81
      %p231 = pneg %p78
      %p232 = pneg %p102
      %p233 = pneg %p99
      %p234 = pneg %p123
      %p235 = pneg %p120
      %p236 = pneg %p149
      %p237 = pneg %p146
      %p238 = scmp.lt.s32.totalorder %s18, 1
      %s239 = scalar_select %p238, %s18, 1
      %s240 = smul.addr %s239, 8
      %s241 = smul.addr %s240, 4
      %s242 = scalar_lea.vmem %s5, %s241
      %p243 = pneg %p175
      %p244 = pneg %p172
      %p245 = scmp.lt.s32.totalorder %s18, 1
      %s246 = scalar_select %p245, %s18, 1
      %s247 = smul.addr %s246, 2
      %s248 = scalar_lea.vmem %s6, %s247
      %p249 = scmp.lt.s32.totalorder %s18, 1
      %s250 = scalar_select %p249, %s18, 1
      %s251 = smul.addr %s250, 8
      %s252 = smul.addr %s251, 4
      %s253 = scalar_lea.vmem %s0, %s252
      %p254 = scmp.lt.s32.totalorder %s18, 1
      %s255 = scalar_select %p254, %s18, 1
      %s256 = smul.addr %s255, 8
      %s257 = smul.addr %s256, 4
      %s258 = scalar_lea.vmem %s5, %s257
      %p259 = scmp.lt.s32.totalorder %s18, 1
      %s260 = scalar_select %p259, %s18, 1
      %s261 = smul.addr %s260, 2
      %s262 = scalar_lea.vmem %s6, %s261
      %v264 = vld [vmem:[%s253] sm:$0xf]
      %v265 = vld [vmem:[%s253 + $0x4] sm:$0xf]
      %v266 = vld [vmem:[%s253 + $0x8] sm:$0xf]
      %v267 = vld [vmem:[%s253 + $0xc] sm:$0xf]
      %v268 = vld [vmem:[%s253 + $0x10] sm:$0xf]
      %v269 = vld [vmem:[%s253 + $0x14] sm:$0xf]
      %v270 = vld [vmem:[%s253 + $0x18] sm:$0xf]
      %v271 = vld [vmem:[%s253 + $0x1c] sm:$0xf]
      %v272 = vunpack.c.l.bf16 %v264
      %v273 = vunpack.c.l.bf16 %v265
      %v274 = vunpack.c.l.bf16 %v266
      %v275 = vunpack.c.l.bf16 %v267
      %v276 = vunpack.c.l.bf16 %v268
      %v277 = vunpack.c.l.bf16 %v269
      %v278 = vunpack.c.l.bf16 %v270
      %v279 = vunpack.c.l.bf16 %v271
      %v280 = vld [vmem:[%s3] sm:$0x1]
      %v282 = vperm.slane %v280, 0
      %v284 = vmul.f32 %v272, %v282
      %v285 = vmul.f32 %v273, %v282
      %v286 = vmul.f32 %v274, %v282
      %v287 = vmul.f32 %v275, %v282
      %v288 = vmul.f32 %v276, %v282
      %v289 = vmul.f32 %v277, %v282
      %v290 = vmul.f32 %v278, %v282
      %v291 = vmul.f32 %v279, %v282
      %v292 = vld [vmem:[%s4] sm:$0x1]
      %v294 = vperm.slane %v292, 0
      %v296 = vadd.f32 %v284, %v294
      %v297 = vadd.f32 %v285, %v294
      %v298 = vadd.f32 %v286, %v294
      %v299 = vadd.f32 %v287, %v294
      %v300 = vadd.f32 %v288, %v294
      %v301 = vadd.f32 %v289, %v294
      %v302 = vadd.f32 %v290, %v294
      %v303 = vadd.f32 %v291, %v294
      %v304 = vmax.f32 %v296, 0.0
      %v305 = vmax.f32 %v297, 0.0
      %v306 = vmax.f32 %v298, 0.0
      %v307 = vmax.f32 %v299, 0.0
      %v308 = vmax.f32 %v300, 0.0
      %v309 = vmax.f32 %v301, 0.0
      %v310 = vmax.f32 %v302, 0.0
      %v311 = vmax.f32 %v303, 0.0
      %vm312 = vcmask 64512
      %313 = vst.msk [vmem:[#allocation2] sm:$0xff] %vm312, 0.0
      %vm314 = vcmask 58368
      %315 = vst.msk [vmem:[#allocation2 + $0x8] sm:$0x3] %vm314, 0.0
      %s316 = scalar_lea.vmem [#allocation2], 144
      %317 = vst.msk [vmem:[%s316] sm:$0xff] %vm312, 0.0
      %318 = vst.msk [vmem:[%s316 + $0x8] sm:$0x3] %vm314, 0.0
      %vm319 = vcmask 57344
      %320 = vst.msk [vmem:[#allocation2] sm:$0x1] %vm319, 0.0
      %321 = vst.msk [vmem:[#allocation2 + $0x10] sm:$0x1] %vm319, 0.0
      %322 = vst.msk [vmem:[#allocation2 + $0x20] sm:$0x1] %vm319, 0.0
      %323 = vst.msk [vmem:[#allocation2 + $0x30] sm:$0x1] %vm319, 0.0
      %324 = vst.msk [vmem:[#allocation2 + $0x40] sm:$0x1] %vm319, 0.0
      %325 = vst.msk [vmem:[#allocation2 + $0x50] sm:$0x1] %vm319, 0.0
      %326 = vst.msk [vmem:[#allocation2 + $0x60] sm:$0x1] %vm319, 0.0
      %327 = vst.msk [vmem:[#allocation2 + $0x70] sm:$0x1] %vm319, 0.0
      %328 = vst.msk [vmem:[#allocation2 + $0x80] sm:$0x1] %vm319, 0.0
      %329 = vst.msk [vmem:[#allocation2 + $0x90] sm:$0x1] %vm319, 0.0
      %330 = vst.msk [vmem:[#allocation2 + $0x9] sm:$0x1] %vm319, 0.0
      %331 = vst.msk [vmem:[#allocation2 + $0x19] sm:$0x1] %vm319, 0.0
      %332 = vst.msk [vmem:[#allocation2 + $0x29] sm:$0x1] %vm319, 0.0
      %333 = vst.msk [vmem:[#allocation2 + $0x39] sm:$0x1] %vm319, 0.0
      %334 = vst.msk [vmem:[#allocation2 + $0x49] sm:$0x1] %vm319, 0.0
      %335 = vst.msk [vmem:[#allocation2 + $0x59] sm:$0x1] %vm319, 0.0
      %336 = vst.msk [vmem:[#allocation2 + $0x69] sm:$0x1] %vm319, 0.0
      %337 = vst.msk [vmem:[#allocation2 + $0x79] sm:$0x1] %vm319, 0.0
      %338 = vst.msk [vmem:[#allocation2 + $0x89] sm:$0x1] %vm319, 0.0
      %339 = vst.msk [vmem:[#allocation2 + $0x99] sm:$0x1] %vm319, 0.0
      %s340 = scalar_lea.vmem [#allocation2], 16
      %341 = vst.msk [vmem:[%s340 + $0x1] sm:$0xff] %vm312, %v304
      %342 = vst.msk [vmem:[%s340 + $0x11] sm:$0xff] %vm312, %v305
      %343 = vst.msk [vmem:[%s340 + $0x21] sm:$0xff] %vm312, %v306
      %344 = vst.msk [vmem:[%s340 + $0x31] sm:$0xff] %vm312, %v307
      %345 = vst.msk [vmem:[%s340 + $0x41] sm:$0xff] %vm312, %v308
      %346 = vst.msk [vmem:[%s340 + $0x51] sm:$0xff] %vm312, %v309
      %347 = vst.msk [vmem:[%s340 + $0x61] sm:$0xff] %vm312, %v310
      %348 = vst.msk [vmem:[%s340 + $0x71] sm:$0xff] %vm312, %v311
      %v349 = vld [vmem:[#allocation2] sm:$0xff]
      %v350 = vld [vmem:[#allocation2 + $0x10] sm:$0xff]
      %v351 = vld [vmem:[#allocation2 + $0x20] sm:$0xff]
      %v352 = vld [vmem:[#allocation2 + $0x30] sm:$0xff]
      %v353 = vld [vmem:[#allocation2 + $0x40] sm:$0xff]
      %v354 = vld [vmem:[#allocation2 + $0x50] sm:$0xff]
      %v355 = vld [vmem:[#allocation2 + $0x60] sm:$0xff]
      %v356 = vld [vmem:[#allocation2 + $0x70] sm:$0xff]
      %v357 = vpack.c.bf16 %v349, %v349
      %v358 = vpack.c.bf16 %v350, %v350
      %v359 = vpack.c.bf16 %v351, %v351
      %v360 = vpack.c.bf16 %v352, %v352
      %v361 = vpack.c.bf16 %v353, %v353
      %v362 = vpack.c.bf16 %v354, %v354
      %v363 = vpack.c.bf16 %v355, %v355
      %v364 = vpack.c.bf16 %v356, %v356
      %vm365 = vcmask 60416
      %366 = vst.msk [vmem:[#allocation3] sm:$0xf] %vm365, %v357
      %367 = vst.msk [vmem:[#allocation3 + $0x4] sm:$0xf] %vm365, %v358
      %368 = vst.msk [vmem:[#allocation3 + $0x8] sm:$0xf] %vm365, %v359
      %369 = vst.msk [vmem:[#allocation3 + $0xc] sm:$0xf] %vm365, %v360
      %370 = vst.msk [vmem:[#allocation3 + $0x10] sm:$0xf] %vm365, %v361
      %371 = vst.msk [vmem:[#allocation3 + $0x14] sm:$0xf] %vm365, %v362
      %372 = vst.msk [vmem:[#allocation3 + $0x18] sm:$0xf] %vm365, %v363
      %373 = vst.msk [vmem:[#allocation3 + $0x1c] sm:$0xf] %vm365, %v364
      %v374 = vld [vmem:[#allocation2 + $0x1] sm:$0xff]
      %v375 = vld [vmem:[#allocation2 + $0x11] sm:$0xff]
      %v376 = vld [vmem:[#allocation2 + $0x21] sm:$0xff]
      %v377 = vld [vmem:[#allocation2 + $0x31] sm:$0xff]
      %v378 = vld [vmem:[#allocation2 + $0x41] sm:$0xff]
      %v379 = vld [vmem:[#allocation2 + $0x51] sm:$0xff]
      %v380 = vld [vmem:[#allocation2 + $0x61] sm:$0xff]
      %v381 = vld [vmem:[#allocation2 + $0x71] sm:$0xff]
      %v382 = vpack.c.bf16 %v374, %v374
      %v383 = vpack.c.bf16 %v375, %v375
      %v384 = vpack.c.bf16 %v376, %v376
      %v385 = vpack.c.bf16 %v377, %v377
      %v386 = vpack.c.bf16 %v378, %v378
      %v387 = vpack.c.bf16 %v379, %v379
      %v388 = vpack.c.bf16 %v380, %v380
      %v389 = vpack.c.bf16 %v381, %v381
      %398 = vrot.lane.b32.xlu0 %v382, 8
      %v399 = vpop.permute.xlu0 %398
      %400 = vrot.lane.b32.xlu0 %v383, 8
      %v401 = vpop.permute.xlu0 %400
      %402 = vrot.lane.b32.xlu0 %v384, 8
      %v403 = vpop.permute.xlu0 %402
      %404 = vrot.lane.b32.xlu0 %v385, 8
      %v405 = vpop.permute.xlu0 %404
      %406 = vrot.lane.b32.xlu0 %v386, 8
      %v407 = vpop.permute.xlu0 %406
      %408 = vrot.lane.b32.xlu0 %v387, 8
      %v409 = vpop.permute.xlu0 %408
      %410 = vrot.lane.b32.xlu0 %v388, 8
      %v411 = vpop.permute.xlu0 %410
      %412 = vrot.lane.b32.xlu0 %v389, 8
      %v413 = vpop.permute.xlu0 %412
      %vm422 = vcmask 126016
      %423 = vst.msk [vmem:[#allocation3] sm:$0xf] %vm422, %v399
      %424 = vst.msk [vmem:[#allocation3 + $0x4] sm:$0xf] %vm422, %v401
      %425 = vst.msk [vmem:[#allocation3 + $0x8] sm:$0xf] %vm422, %v403
      %426 = vst.msk [vmem:[#allocation3 + $0xc] sm:$0xf] %vm422, %v405
      %427 = vst.msk [vmem:[#allocation3 + $0x10] sm:$0xf] %vm422, %v407
      %428 = vst.msk [vmem:[#allocation3 + $0x14] sm:$0xf] %vm422, %v409
      %429 = vst.msk [vmem:[#allocation3 + $0x18] sm:$0xf] %vm422, %v411
      %430 = vst.msk [vmem:[#allocation3 + $0x1c] sm:$0xf] %vm422, %v413
      %v431 = vld [vmem:[#allocation2 + $0x2] sm:$0xff]
      %v432 = vld [vmem:[#allocation2 + $0x12] sm:$0xff]
      %v433 = vld [vmem:[#allocation2 + $0x22] sm:$0xff]
      %v434 = vld [vmem:[#allocation2 + $0x32] sm:$0xff]
      %v435 = vld [vmem:[#allocation2 + $0x42] sm:$0xff]
      %v436 = vld [vmem:[#allocation2 + $0x52] sm:$0xff]
      %v437 = vld [vmem:[#allocation2 + $0x62] sm:$0xff]
      %v438 = vld [vmem:[#allocation2 + $0x72] sm:$0xff]
      %v439 = vpack.c.bf16 %v431, %v431
      %v440 = vpack.c.bf16 %v432, %v432
      %v441 = vpack.c.bf16 %v433, %v433
      %v442 = vpack.c.bf16 %v434, %v434
      %v443 = vpack.c.bf16 %v435, %v435
      %v444 = vpack.c.bf16 %v436, %v436
      %v445 = vpack.c.bf16 %v437, %v437
      %v446 = vpack.c.bf16 %v438, %v438
      %455 = vrot.lane.b32.xlu0 %v439, 16
      %v456 = vpop.permute.xlu0 %455
      %457 = vrot.lane.b32.xlu0 %v440, 16
      %v458 = vpop.permute.xlu0 %457
      %459 = vrot.lane.b32.xlu0 %v441, 16
      %v460 = vpop.permute.xlu0 %459
      %461 = vrot.lane.b32.xlu0 %v442, 16
      %v462 = vpop.permute.xlu0 %461
      %463 = vrot.lane.b32.xlu0 %v443, 16
      %v464 = vpop.permute.xlu0 %463
      %465 = vrot.lane.b32.xlu0 %v444, 16
      %v466 = vpop.permute.xlu0 %465
      %467 = vrot.lane.b32.xlu0 %v445, 16
      %v468 = vpop.permute.xlu0 %467
      %469 = vrot.lane.b32.xlu0 %v446, 16
      %v470 = vpop.permute.xlu0 %469
      %vm479 = vcmask 191616
      %480 = vst.msk [vmem:[#allocation3] sm:$0xf] %vm479, %v456
      %481 = vst.msk [vmem:[#allocation3 + $0x4] sm:$0xf] %vm479, %v458
      %482 = vst.msk [vmem:[#allocation3 + $0x8] sm:$0xf] %vm479, %v460
      %483 = vst.msk [vmem:[#allocation3 + $0xc] sm:$0xf] %vm479, %v462
      %484 = vst.msk [vmem:[#allocation3 + $0x10] sm:$0xf] %vm479, %v464
      %485 = vst.msk [vmem:[#allocation3 + $0x14] sm:$0xf] %vm479, %v466
      %486 = vst.msk [vmem:[#allocation3 + $0x18] sm:$0xf] %vm479, %v468
      %487 = vst.msk [vmem:[#allocation3 + $0x1c] sm:$0xf] %vm479, %v470
      %v488 = vld [vmem:[%s340] sm:$0xff]
      %v489 = vld [vmem:[%s340 + $0x10] sm:$0xff]
      %v490 = vld [vmem:[%s340 + $0x20] sm:$0xff]
      %v491 = vld [vmem:[%s340 + $0x30] sm:$0xff]
      %v492 = vld [vmem:[%s340 + $0x40] sm:$0xff]
      %v493 = vld [vmem:[%s340 + $0x50] sm:$0xff]
      %v494 = vld [vmem:[%s340 + $0x60] sm:$0xff]
      %v495 = vld [vmem:[%s340 + $0x70] sm:$0xff]
      %v496 = vpack.c.bf16 %v488, %v488
      %v497 = vpack.c.bf16 %v489, %v489
      %v498 = vpack.c.bf16 %v490, %v490
      %v499 = vpack.c.bf16 %v491, %v491
      %v500 = vpack.c.bf16 %v492, %v492
      %v501 = vpack.c.bf16 %v493, %v493
      %v502 = vpack.c.bf16 %v494, %v494
      %v503 = vpack.c.bf16 %v495, %v495
      %512 = vrot.lane.b32.xlu0 %v496, 24
      %v513 = vpop.permute.xlu0 %512
      %514 = vrot.lane.b32.xlu0 %v497, 24
      %v515 = vpop.permute.xlu0 %514
      %516 = vrot.lane.b32.xlu0 %v498, 24
      %v517 = vpop.permute.xlu0 %516
      %518 = vrot.lane.b32.xlu0 %v499, 24
      %v519 = vpop.permute.xlu0 %518
      %520 = vrot.lane.b32.xlu0 %v500, 24
      %v521 = vpop.permute.xlu0 %520
      %522 = vrot.lane.b32.xlu0 %v501, 24
      %v523 = vpop.permute.xlu0 %522
      %524 = vrot.lane.b32.xlu0 %v502, 24
      %v525 = vpop.permute.xlu0 %524
      %526 = vrot.lane.b32.xlu0 %v503, 24
      %v527 = vpop.permute.xlu0 %526
      %vm536 = vcmask 257216
      %537 = vst.msk [vmem:[#allocation3] sm:$0xf] %vm536, %v513
      %538 = vst.msk [vmem:[#allocation3 + $0x4] sm:$0xf] %vm536, %v515
      %539 = vst.msk [vmem:[#allocation3 + $0x8] sm:$0xf] %vm536, %v517
      %540 = vst.msk [vmem:[#allocation3 + $0xc] sm:$0xf] %vm536, %v519
      %541 = vst.msk [vmem:[#allocation3 + $0x10] sm:$0xf] %vm536, %v521
      %542 = vst.msk [vmem:[#allocation3 + $0x14] sm:$0xf] %vm536, %v523
      %543 = vst.msk [vmem:[#allocation3 + $0x18] sm:$0xf] %vm536, %v525
      %544 = vst.msk [vmem:[#allocation3 + $0x1c] sm:$0xf] %vm536, %v527
      %v545 = vld [vmem:[%s340 + $0x1] sm:$0xff]
      %v546 = vld [vmem:[%s340 + $0x11] sm:$0xff]
      %v547 = vld [vmem:[%s340 + $0x21] sm:$0xff]
      %v548 = vld [vmem:[%s340 + $0x31] sm:$0xff]
      %v549 = vld [vmem:[%s340 + $0x41] sm:$0xff]
      %v550 = vld [vmem:[%s340 + $0x51] sm:$0xff]
      %v551 = vld [vmem:[%s340 + $0x61] sm:$0xff]
      %v552 = vld [vmem:[%s340 + $0x71] sm:$0xff]
      %v553 = vpack.c.bf16 %v545, %v545
      %v554 = vpack.c.bf16 %v546, %v546
      %v555 = vpack.c.bf16 %v547, %v547
      %v556 = vpack.c.bf16 %v548, %v548
      %v557 = vpack.c.bf16 %v549, %v549
      %v558 = vpack.c.bf16 %v550, %v550
      %v559 = vpack.c.bf16 %v551, %v551
      %v560 = vpack.c.bf16 %v552, %v552
      %569 = vrot.lane.b32.xlu0 %v553, 32
      %v570 = vpop.permute.xlu0 %569
      %571 = vrot.lane.b32.xlu0 %v554, 32
      %v572 = vpop.permute.xlu0 %571
      %573 = vrot.lane.b32.xlu0 %v555, 32
      %v574 = vpop.permute.xlu0 %573
      %575 = vrot.lane.b32.xlu0 %v556, 32
      %v576 = vpop.permute.xlu0 %575
      %577 = vrot.lane.b32.xlu0 %v557, 32
      %v578 = vpop.permute.xlu0 %577
      %579 = vrot.lane.b32.xlu0 %v558, 32
      %v580 = vpop.permute.xlu0 %579
      %581 = vrot.lane.b32.xlu0 %v559, 32
      %v582 = vpop.permute.xlu0 %581
      %583 = vrot.lane.b32.xlu0 %v560, 32
      %v584 = vpop.permute.xlu0 %583
      %vm593 = vcmask 322816
      %594 = vst.msk [vmem:[#allocation3] sm:$0xf] %vm593, %v570
      %595 = vst.msk [vmem:[#allocation3 + $0x4] sm:$0xf] %vm593, %v572
      %596 = vst.msk [vmem:[#allocation3 + $0x8] sm:$0xf] %vm593, %v574
      %597 = vst.msk [vmem:[#allocation3 + $0xc] sm:$0xf] %vm593, %v576
      %598 = vst.msk [vmem:[#allocation3 + $0x10] sm:$0xf] %vm593, %v578
      %599 = vst.msk [vmem:[#allocation3 + $0x14] sm:$0xf] %vm593, %v580
      %600 = vst.msk [vmem:[#allocation3 + $0x18] sm:$0xf] %vm593, %v582
      %601 = vst.msk [vmem:[#allocation3 + $0x1c] sm:$0xf] %vm593, %v584
      %v602 = vld [vmem:[%s340 + $0x2] sm:$0xff]
      %v603 = vld [vmem:[%s340 + $0x12] sm:$0xff]
      %v604 = vld [vmem:[%s340 + $0x22] sm:$0xff]
      %v605 = vld [vmem:[%s340 + $0x32] sm:$0xff]
      %v606 = vld [vmem:[%s340 + $0x42] sm:$0xff]
      %v607 = vld [vmem:[%s340 + $0x52] sm:$0xff]
      %v608 = vld [vmem:[%s340 + $0x62] sm:$0xff]
      %v609 = vld [vmem:[%s340 + $0x72] sm:$0xff]
      %v610 = vpack.c.bf16 %v602, %v602
      %v611 = vpack.c.bf16 %v603, %v603
      %v612 = vpack.c.bf16 %v604, %v604
      %v613 = vpack.c.bf16 %v605, %v605
      %v614 = vpack.c.bf16 %v606, %v606
      %v615 = vpack.c.bf16 %v607, %v607
      %v616 = vpack.c.bf16 %v608, %v608
      %v617 = vpack.c.bf16 %v609, %v609
      %626 = vrot.lane.b32.xlu0 %v610, 40
      %v627 = vpop.permute.xlu0 %626
      %628 = vrot.lane.b32.xlu0 %v611, 40
      %v629 = vpop.permute.xlu0 %628
      %630 = vrot.lane.b32.xlu0 %v612, 40
      %v631 = vpop.permute.xlu0 %630
      %632 = vrot.lane.b32.xlu0 %v613, 40
      %v633 = vpop.permute.xlu0 %632
      %634 = vrot.lane.b32.xlu0 %v614, 40
      %v635 = vpop.permute.xlu0 %634
      %636 = vrot.lane.b32.xlu0 %v615, 40
      %v637 = vpop.permute.xlu0 %636
      %638 = vrot.lane.b32.xlu0 %v616, 40
      %v639 = vpop.permute.xlu0 %638
      %640 = vrot.lane.b32.xlu0 %v617, 40
      %v641 = vpop.permute.xlu0 %640
      %vm650 = vcmask 388416
      %651 = vst.msk [vmem:[#allocation3] sm:$0xf] %vm650, %v627
      %652 = vst.msk [vmem:[#allocation3 + $0x4] sm:$0xf] %vm650, %v629
      %653 = vst.msk [vmem:[#allocation3 + $0x8] sm:$0xf] %vm650, %v631
      %654 = vst.msk [vmem:[#allocation3 + $0xc] sm:$0xf] %vm650, %v633
      %655 = vst.msk [vmem:[#allocation3 + $0x10] sm:$0xf] %vm650, %v635
      %656 = vst.msk [vmem:[#allocation3 + $0x14] sm:$0xf] %vm650, %v637
      %657 = vst.msk [vmem:[#allocation3 + $0x18] sm:$0xf] %vm650, %v639
      %658 = vst.msk [vmem:[#allocation3 + $0x1c] sm:$0xf] %vm650, %v641
      %s659 = scalar_lea.vmem [#allocation2], 32
      %v660 = vld [vmem:[%s659] sm:$0xff]
      %v661 = vld [vmem:[%s659 + $0x10] sm:$0xff]
      %v662 = vld [vmem:[%s659 + $0x20] sm:$0xff]
      %v663 = vld [vmem:[%s659 + $0x30] sm:$0xff]
      %v664 = vld [vmem:[%s659 + $0x40] sm:$0xff]
      %v665 = vld [vmem:[%s659 + $0x50] sm:$0xff]
      %v666 = vld [vmem:[%s659 + $0x60] sm:$0xff]
      %v667 = vld [vmem:[%s659 + $0x70] sm:$0xff]
      %v668 = vpack.c.bf16 %v660, %v660
      %v669 = vpack.c.bf16 %v661, %v661
      %v670 = vpack.c.bf16 %v662, %v662
      %v671 = vpack.c.bf16 %v663, %v663
      %v672 = vpack.c.bf16 %v664, %v664
      %v673 = vpack.c.bf16 %v665, %v665
      %v674 = vpack.c.bf16 %v666, %v666
      %v675 = vpack.c.bf16 %v667, %v667
      %684 = vrot.lane.b32.xlu0 %v668, 48
      %v685 = vpop.permute.xlu0 %684
      %686 = vrot.lane.b32.xlu0 %v669, 48
      %v687 = vpop.permute.xlu0 %686
      %688 = vrot.lane.b32.xlu0 %v670, 48
      %v689 = vpop.permute.xlu0 %688
      %690 = vrot.lane.b32.xlu0 %v671, 48
      %v691 = vpop.permute.xlu0 %690
      %692 = vrot.lane.b32.xlu0 %v672, 48
      %v693 = vpop.permute.xlu0 %692
      %694 = vrot.lane.b32.xlu0 %v673, 48
      %v695 = vpop.permute.xlu0 %694
      %696 = vrot.lane.b32.xlu0 %v674, 48
      %v697 = vpop.permute.xlu0 %696
      %698 = vrot.lane.b32.xlu0 %v675, 48
      %v699 = vpop.permute.xlu0 %698
      %vm708 = vcmask 454016
      %709 = vst.msk [vmem:[#allocation3] sm:$0xf] %vm708, %v685
      %710 = vst.msk [vmem:[#allocation3 + $0x4] sm:$0xf] %vm708, %v687
      %711 = vst.msk [vmem:[#allocation3 + $0x8] sm:$0xf] %vm708, %v689
      %712 = vst.msk [vmem:[#allocation3 + $0xc] sm:$0xf] %vm708, %v691
      %713 = vst.msk [vmem:[#allocation3 + $0x10] sm:$0xf] %vm708, %v693
      %714 = vst.msk [vmem:[#allocation3 + $0x14] sm:$0xf] %vm708, %v695
      %715 = vst.msk [vmem:[#allocation3 + $0x18] sm:$0xf] %vm708, %v697
      %716 = vst.msk [vmem:[#allocation3 + $0x1c] sm:$0xf] %vm708, %v699
      %v717 = vld [vmem:[%s659 + $0x1] sm:$0xff]
      %v718 = vld [vmem:[%s659 + $0x11] sm:$0xff]
      %v719 = vld [vmem:[%s659 + $0x21] sm:$0xff]
      %v720 = vld [vmem:[%s659 + $0x31] sm:$0xff]
      %v721 = vld [vmem:[%s659 + $0x41] sm:$0xff]
      %v722 = vld [vmem:[%s659 + $0x51] sm:$0xff]
      %v723 = vld [vmem:[%s659 + $0x61] sm:$0xff]
      %v724 = vld [vmem:[%s659 + $0x71] sm:$0xff]
      %v725 = vpack.c.bf16 %v717, %v717
      %v726 = vpack.c.bf16 %v718, %v718
      %v727 = vpack.c.bf16 %v719, %v719
      %v728 = vpack.c.bf16 %v720, %v720
      %v729 = vpack.c.bf16 %v721, %v721
      %v730 = vpack.c.bf16 %v722, %v722
      %v731 = vpack.c.bf16 %v723, %v723
      %v732 = vpack.c.bf16 %v724, %v724
      %741 = vrot.lane.b32.xlu0 %v725, 56
      %v742 = vpop.permute.xlu0 %741
      %743 = vrot.lane.b32.xlu0 %v726, 56
      %v744 = vpop.permute.xlu0 %743
      %745 = vrot.lane.b32.xlu0 %v727, 56
      %v746 = vpop.permute.xlu0 %745
      %747 = vrot.lane.b32.xlu0 %v728, 56
      %v748 = vpop.permute.xlu0 %747
      %749 = vrot.lane.b32.xlu0 %v729, 56
      %v750 = vpop.permute.xlu0 %749
      %751 = vrot.lane.b32.xlu0 %v730, 56
      %v752 = vpop.permute.xlu0 %751
      %753 = vrot.lane.b32.xlu0 %v731, 56
      %v754 = vpop.permute.xlu0 %753
      %755 = vrot.lane.b32.xlu0 %v732, 56
      %v756 = vpop.permute.xlu0 %755
      %vm765 = vcmask 519616
      %766 = vst.msk [vmem:[#allocation3] sm:$0xf] %vm765, %v742
      %767 = vst.msk [vmem:[#allocation3 + $0x4] sm:$0xf] %vm765, %v744
      %768 = vst.msk [vmem:[#allocation3 + $0x8] sm:$0xf] %vm765, %v746
      %769 = vst.msk [vmem:[#allocation3 + $0xc] sm:$0xf] %vm765, %v748
      %770 = vst.msk [vmem:[#allocation3 + $0x10] sm:$0xf] %vm765, %v750
      %771 = vst.msk [vmem:[#allocation3 + $0x14] sm:$0xf] %vm765, %v752
      %772 = vst.msk [vmem:[#allocation3 + $0x18] sm:$0xf] %vm765, %v754
      %773 = vst.msk [vmem:[#allocation3 + $0x1c] sm:$0xf] %vm765, %v756
      %v774 = vld [vmem:[%s659 + $0x2] sm:$0xff]
      %v775 = vld [vmem:[%s659 + $0x12] sm:$0xff]
      %v776 = vld [vmem:[%s659 + $0x22] sm:$0xff]
      %v777 = vld [vmem:[%s659 + $0x32] sm:$0xff]
      %v778 = vld [vmem:[%s659 + $0x42] sm:$0xff]
      %v779 = vld [vmem:[%s659 + $0x52] sm:$0xff]
      %v780 = vld [vmem:[%s659 + $0x62] sm:$0xff]
      %v781 = vld [vmem:[%s659 + $0x72] sm:$0xff]
      %v782 = vpack.c.bf16 %v774, %v774
      %v783 = vpack.c.bf16 %v775, %v775
      %v784 = vpack.c.bf16 %v776, %v776
      %v785 = vpack.c.bf16 %v777, %v777
      %v786 = vpack.c.bf16 %v778, %v778
      %v787 = vpack.c.bf16 %v779, %v779
      %v788 = vpack.c.bf16 %v780, %v780
      %v789 = vpack.c.bf16 %v781, %v781
      %798 = vrot.lane.b32.xlu0 %v782, 64
      %v799 = vpop.permute.xlu0 %798
      %800 = vrot.lane.b32.xlu0 %v783, 64
      %v801 = vpop.permute.xlu0 %800
      %802 = vrot.lane.b32.xlu0 %v784, 64
      %v803 = vpop.permute.xlu0 %802
      %804 = vrot.lane.b32.xlu0 %v785, 64
      %v805 = vpop.permute.xlu0 %804
      %806 = vrot.lane.b32.xlu0 %v786, 64
      %v807 = vpop.permute.xlu0 %806
      %808 = vrot.lane.b32.xlu0 %v787, 64
      %v809 = vpop.permute.xlu0 %808
      %810 = vrot.lane.b32.xlu0 %v788, 64
      %v811 = vpop.permute.xlu0 %810
      %812 = vrot.lane.b32.xlu0 %v789, 64
      %v813 = vpop.permute.xlu0 %812
      %vm822 = vcmask 585216
      %823 = vst.msk [vmem:[#allocation3] sm:$0xf] %vm822, %v799
      %824 = vst.msk [vmem:[#allocation3 + $0x4] sm:$0xf] %vm822, %v801
      %825 = vst.msk [vmem:[#allocation3 + $0x8] sm:$0xf] %vm822, %v803
      %826 = vst.msk [vmem:[#allocation3 + $0xc] sm:$0xf] %vm822, %v805
      %827 = vst.msk [vmem:[#allocation3 + $0x10] sm:$0xf] %vm822, %v807
      %828 = vst.msk [vmem:[#allocation3 + $0x14] sm:$0xf] %vm822, %v809
      %829 = vst.msk [vmem:[#allocation3 + $0x18] sm:$0xf] %vm822, %v811
      %830 = vst.msk [vmem:[#allocation3 + $0x1c] sm:$0xf] %vm822, %v813
      %v831 = vld [vmem:[#allocation3] sm:$0xf]
      %v832 = vld [vmem:[#allocation3 + $0x4] sm:$0xf]
      %v833 = vld [vmem:[#allocation3 + $0x8] sm:$0xf]
      %v834 = vld [vmem:[#allocation3 + $0xc] sm:$0xf]
      %v835 = vld [vmem:[#allocation3 + $0x10] sm:$0xf]
      %v836 = vld [vmem:[#allocation3 + $0x14] sm:$0xf]
      %v837 = vld [vmem:[#allocation3 + $0x18] sm:$0xf]
      %v838 = vld [vmem:[#allocation3 + $0x1c] sm:$0xf]
      %v839 = vld [vmem:[%s1] sm:$0xf]
      %v840 = vld [vmem:[%s1 + $0x4] sm:$0xf]
      %v841 = vld [vmem:[%s1 + $0x8] sm:$0xf]
      %v842 = vld [vmem:[%s1 + $0xc] sm:$0xf]
      %v843 = vld [vmem:[%s1 + $0x10] sm:$0xf]
      %v844 = vld [vmem:[%s1 + $0x14] sm:$0xf]
      %v845 = vld [vmem:[%s1 + $0x18] sm:$0xf]
      %v846 = vld [vmem:[%s1 + $0x1c] sm:$0xf]
      %v847 = vld [vmem:[%s1 + $0x20] sm:$0xf]
      %v848 = vld [vmem:[%s2] sm:$0x1]
      %v850 = vperm.slane %v848, 0
      %v860 = vunpack.c.l.b16 %v831
      %v861 = vunpack.c.l.b16 %v832
      %v862 = vunpack.c.l.b16 %v833
      %v863 = vunpack.c.l.b16 %v834
      %v864 = vunpack.c.l.b16 %v835
      %v865 = vunpack.c.l.b16 %v836
      %v866 = vunpack.c.l.b16 %v837
      %v867 = vunpack.c.l.b16 %v838
      %v868 = vpack.c.b16 %v861, %v860
      %v869 = vpack.c.b16 %v863, %v862
      %v870 = vpack.c.b16 %v865, %v864
      %v871 = vpack.c.b16 %v867, %v866
      %v881 = vunpack.c.l.b16 %v839
      %v882 = vunpack.c.l.b16 %v840
      %v883 = vunpack.c.l.b16 %v841
      %v884 = vunpack.c.l.b16 %v842
      %v885 = vunpack.c.l.b16 %v843
      %v886 = vunpack.c.l.b16 %v844
      %v887 = vunpack.c.l.b16 %v845
      %v888 = vunpack.c.l.b16 %v846
      %v889 = vunpack.c.l.b16 %v847
      %v890 = vpack.c.b16 %v882, %v881
      %v891 = vpack.c.b16 %v884, %v883
      %v892 = vpack.c.b16 %v886, %v885
      %v893 = vpack.c.b16 %v888, %v887
      %v894 = vpack.c.b16 %v889, %v889
      %vm899 = vcmask 588800
      %v901 = vsel %vm899, %v868, 0
      %v904 = vsel %vm899, %v869, 0
      %v907 = vsel %vm899, %v870, 0
      %v910 = vsel %vm899, %v871, 0
      %vm912 = vcmask 1043456
      %v914 = vsel %vm912, %v894, 0
      %916 = vmatpush.bf16.msra.mxu0 0
      %917 = vmatpush.bf16.msra.mxu0 0
      %918 = vmatpush.bf16.msra.mxu0 0
      %919 = vmatpush.bf16.msra.mxu0 %v914
      %920 = vmatpush.bf16.msra.mxu0 %v893
      %921 = vmatpush.bf16.msra.mxu0 %v892
      %922 = vmatpush.bf16.msra.mxu0 %v891
      %923 = vmatpush.bf16.msra.mxu0 %v890
      %924 = vmatmul.bf16.gmra.mxu0 %v901
      %v925 = vpop.f32.mrf.mxu0
      %v926 = vadd.f32 %v850, %v925
      %v927 = vpop.f32.mrf.mxu0
      %v928 = vadd.f32 %v850, %v927
      %929 = vmatmul.bf16.gmra.mxu0 %v904
      %v930 = vpop.f32.mrf.mxu0
      %v931 = vadd.f32 %v850, %v930
      %v932 = vpop.f32.mrf.mxu0
      %v933 = vadd.f32 %v850, %v932
      %934 = vmatmul.bf16.gmra.mxu0 %v907
      %v935 = vpop.f32.mrf.mxu0
      %v936 = vadd.f32 %v850, %v935
      %v937 = vpop.f32.mrf.mxu0
      %v938 = vadd.f32 %v850, %v937
      %939 = vmatmul.bf16.gmra.mxu0 %v910
      %v940 = vpop.f32.mrf.mxu0
      %v941 = vadd.f32 %v850, %v940
      %v942 = vpop.f32.mrf.mxu0
      %v943 = vadd.f32 %v850, %v942
      %944 = vdwg.mxu0
      %v945 = vsel %vm312, %v926, 0.0
      %v946 = vsel %vm312, %v928, 0.0
      %v947 = vadd.f32 %v945, %v946
      %v948 = vsel %vm312, %v931, 0.0
      %v949 = vadd.f32 %v947, %v948
      %v950 = vsel %vm312, %v933, 0.0
      %v951 = vadd.f32 %v949, %v950
      %v952 = vsel %vm312, %v936, 0.0
      %v953 = vadd.f32 %v951, %v952
      %v954 = vsel %vm312, %v938, 0.0
      %v955 = vadd.f32 %v953, %v954
      %v956 = vsel %vm312, %v941, 0.0
      %v957 = vadd.f32 %v955, %v956
      %v958 = vsel %vm312, %v943, 0.0
      %v959 = vadd.f32 %v957, %v958
      %v960 = vrot.slane %v959, 4
      %v961 = vadd.f32 %v959, %v960
      %v962 = vrot.slane %v961, 2
      %v963 = vadd.f32 %v961, %v962
      %v964 = vrot.slane %v963, 1
      %v965 = vadd.f32 %v963, %v964
      %966 = vst.msk [vmem:[%s262] sm:$0x1] %vm319, %v965
      %v967 = vmul.f32 %v926, %v926
      %v968 = vmul.f32 %v928, %v928
      %v969 = vmul.f32 %v931, %v931
      %v970 = vmul.f32 %v933, %v933
      %v971 = vmul.f32 %v936, %v936
      %v972 = vmul.f32 %v938, %v938
      %v973 = vmul.f32 %v941, %v941
      %v974 = vmul.f32 %v943, %v943
      %v975 = vsel %vm312, %v967, 0.0
      %v976 = vsel %vm312, %v968, 0.0
      %v977 = vadd.f32 %v975, %v976
      %v978 = vsel %vm312, %v969, 0.0
      %v979 = vadd.f32 %v977, %v978
      %v980 = vsel %vm312, %v970, 0.0
      %v981 = vadd.f32 %v979, %v980
      %v982 = vsel %vm312, %v971, 0.0
      %v983 = vadd.f32 %v981, %v982
      %v984 = vsel %vm312, %v972, 0.0
      %v985 = vadd.f32 %v983, %v984
      %v986 = vsel %vm312, %v973, 0.0
      %v987 = vadd.f32 %v985, %v986
      %v988 = vsel %vm312, %v974, 0.0
      %v989 = vadd.f32 %v987, %v988
      %v990 = vrot.slane %v989, 4
      %v991 = vadd.f32 %v989, %v990
      %v992 = vrot.slane %v991, 2
      %v993 = vadd.f32 %v991, %v992
      %v994 = vrot.slane %v993, 1
      %v995 = vadd.f32 %v993, %v994
      %996 = vst.msk [vmem:[%s262 + $0x1] sm:$0x1] %vm319, %v995
      %v997 = vpack.c.bf16 %v926, %v926
      %v998 = vpack.c.bf16 %v928, %v928
      %v999 = vpack.c.bf16 %v931, %v931
      %v1000 = vpack.c.bf16 %v933, %v933
      %v1001 = vpack.c.bf16 %v936, %v936
      %v1002 = vpack.c.bf16 %v938, %v938
      %v1003 = vpack.c.bf16 %v941, %v941
      %v1004 = vpack.c.bf16 %v943, %v943
      %1005 = vst.msk [vmem:[%s258] sm:$0xf] %vm365, %v997
      %1006 = vst.msk [vmem:[%s258 + $0x4] sm:$0xf] %vm365, %v998
      %1007 = vst.msk [vmem:[%s258 + $0x8] sm:$0xf] %vm365, %v999
      %1008 = vst.msk [vmem:[%s258 + $0xc] sm:$0xf] %vm365, %v1000
      %1009 = vst.msk [vmem:[%s258 + $0x10] sm:$0xf] %vm365, %v1001
      %1010 = vst.msk [vmem:[%s258 + $0x14] sm:$0xf] %vm365, %v1002
      %1011 = vst.msk [vmem:[%s258 + $0x18] sm:$0xf] %vm365, %v1003
      %1012 = vst.msk [vmem:[%s258 + $0x1c] sm:$0xf] %vm365, %v1004
      %p1013 = scmp.lt.s32.totalorder %s18, 1
      %s1014 = scalar_select %p1013, %s18, 1
      %s1015 = smul.addr %s1014, 8
      %s1016 = smul.addr %s1015, 4
      %s1017 = scalar_lea.vmem %s5, %s1016
      %p1018 = scmp.lt.s32.totalorder %s18, 1
      %s1019 = scalar_select %p1018, %s18, 1
      %s1020 = smul.addr %s1019, 2
      %s1021 = scalar_lea.vmem %s6, %s1020
      // Predicated region
      $region41: #{down_block.4} parent=39 // pred_check
        %p1022 = pneg %p146
      $region42: #{down_block.4} parent=39 // pred_check_branch
        %1024 = sbr.rel (%p1022) target = $region44
      $region43: #{down_block.4} parent=39 // pred_region
        _
      $region44: #{down_block.4} parent=39 // pred_fallthru
        _
      // Predicated region
      $region45: #{down_block.4} parent=39 // pred_check
        %p1025 = pneg %p172
      $region46: #{down_block.4} parent=39 // pred_check_branch
        %1027 = sbr.rel (%p1025) target = $region48
      $region47: #{down_block.4} parent=39 // pred_region
        _
      $region48: #{down_block.4} parent=39 // pred_fallthru
        _
    $region40: #{down_block.4} parent=5 // pred_fallthru
      _
    %p1028 = scmp.le.s32.totalorder 2, %s13
    // Predicated region
    $region49: #{down_block.4} parent=5 // pred_check
      %p1029 = pneg %p1028
    $region50: #{down_block.4} parent=5 // pred_check_branch
      %1031 = sbr.rel (%p1029) target = $region52
    $region51: #{down_block.4} parent=5 // pred_region
      %s1032 = ssub.s32 %s13, 2
      // Predicated region
      $region53: #{down_block.4} parent=51 // pred_check
        %p1033 = pneg %p152
      $region54: #{down_block.4} parent=51 // pred_check_branch
        %1035 = sbr.rel (%p1033) target = $region56
      $region55: #{down_block.4} parent=51 // pred_region
        %p1036 = scmp.lt.s32.totalorder %s19, 1
        %s1037 = scalar_select %p1036, %s19, 1
        %s1038 = smul.addr %s1037, 8
        %s1039 = smul.addr %s1038, 4
        %s1040 = scalar_lea.vmem %s5, %s1039
      $region56: #{down_block.4} parent=51 // pred_fallthru
        _
      // Predicated region
      $region57: #{down_block.4} parent=51 // pred_check
        %p1041 = pneg %p178
      $region58: #{down_block.4} parent=51 // pred_check_branch
        %1043 = sbr.rel (%p1041) target = $region60
      $region59: #{down_block.4} parent=51 // pred_region
        %p1044 = scmp.lt.s32.totalorder %s19, 1
        %s1045 = scalar_select %p1044, %s19, 1
        %s1046 = smul.addr %s1045, 2
        %s1047 = scalar_lea.vmem %s6, %s1046
      $region60: #{down_block.4} parent=51 // pred_fallthru
        _
    $region52: #{down_block.4} parent=5 // pred_fallthru
      _
  $region6: #{down_block.4} parent=0 // loop_footer
    %s17 = sadd.s32 1, %s13
  $region7: #{down_block.4} parent=0 // loop_footer_branch
    %12 = sbr.rel target = $region3
  $region8: #{down_block.4} parent=0 // loop_exit
    _

</llo_original>
